<compile_context>
chip_gen: v7x
topology: tpu7x:2x2x1
jax: 0.10.0
libtpu: 0.0.40
codegen_flags: <defaults>
</compile_context>

<pallas_src>
import functools

import jax
import jax.numpy as jnp
from jax import lax
from jax.experimental import pallas as pl
from jax.experimental.pallas import tpu as pltpu


# ----------------------------- Pallas kernels ------------------------------

def _lstm_layer_kernel(xg_ref, whh_ref, len_ref, seq_ref, hN_ref, cN_ref,
                       h_sc, c_sc, *, hidden):
    """One encoder LSTM layer over the full sequence; grid = (T,).

    xg_ref : (B, 4H) precomputed x_t @ W_ih^T + b for this timestep
    whh_ref: (H, 4H) bf16, VMEM-resident
    len_ref: (B, 1) int32 sequence lengths (carry frozen past length)
    """
    t = pl.program_id(0)

    @pl.when(t == 0)
    def _init():
        h_sc[...] = jnp.zeros_like(h_sc)
        c_sc[...] = jnp.zeros_like(c_sc)

    h = h_sc[...]
    c = c_sc[...]
    gates = xg_ref[...] + jnp.dot(h.astype(jnp.bfloat16), whh_ref[...],
                                  preferred_element_type=jnp.float32)   # (B, 4H)

    # full-vreg nonlinearity: tanh on the g-gate lanes, sigmoid elsewhere
    lane = lax.broadcasted_iota(jnp.int32, gates.shape, 1)
    use_tanh = (lane >= 2 * hidden) & (lane < 3 * hidden)
    act = jnp.where(use_tanh, jnp.tanh(gates), jax.nn.sigmoid(gates))
    i_g = act[:, 0 * hidden:1 * hidden]
    f_g = act[:, 1 * hidden:2 * hidden]
    g_g = act[:, 2 * hidden:3 * hidden]
    o_g = act[:, 3 * hidden:4 * hidden]
    c_new = f_g * c + i_g * g_g
    h_new = o_g * jnp.tanh(c_new)

    # length masking (packed-sequence emulation) inside the kernel
    valid = t < len_ref[...]                       # (B, 1) bool
    h_new = jnp.where(valid, h_new, h)
    c_new = jnp.where(valid, c_new, c)

    h_sc[...] = h_new
    c_sc[...] = c_new
    seq_ref[...] = h_new

    @pl.when(t == pl.num_programs(0) - 1)
    def _fin():
        hN_ref[...] = h_new
        cN_ref[...] = c_new


def lstm_layer(xg_t, whh_bf16, len2d, hidden):
    """xg_t: (T, B, 4H) f32, whh_bf16: (H, 4H) bf16, len2d: (B, 1) int32."""
    T, B, G = xg_t.shape
    H = hidden
    kernel = functools.partial(_lstm_layer_kernel, hidden=H)
    return pl.pallas_call(
        kernel,
        grid=(T,),
        in_specs=[
            pl.BlockSpec((None, B, G), lambda t: (t, 0, 0)),   # x-gates per step
            pl.BlockSpec((H, G), lambda t: (0, 0)),            # W_hh^T resident
            pl.BlockSpec((B, 1), lambda t: (0, 0)),            # lengths resident
        ],
        out_specs=(
            pl.BlockSpec((None, B, H), lambda t: (t, 0, 0)),   # per-step outputs
            pl.BlockSpec((B, H), lambda t: (0, 0)),            # final h
            pl.BlockSpec((B, H), lambda t: (0, 0)),            # final c
        ),
        out_shape=(
            jax.ShapeDtypeStruct((T, B, H), jnp.float32),
            jax.ShapeDtypeStruct((B, H), jnp.float32),
            jax.ShapeDtypeStruct((B, H), jnp.float32),
        ),
        scratch_shapes=[pltpu.VMEM((B, H), jnp.float32),
                        pltpu.VMEM((B, H), jnp.float32)],
        compiler_params=pltpu.CompilerParams(dimension_semantics=("arbitrary",)),
    )(xg_t, whh_bf16, len2d)


def _decoder_kernel(xg0_ref, wih_ref, whh_ref, b_ref, h0_ref, c0_ref,
                    onehot_ref, wout_ref, bout_ref,
                    loss_ref, h_sc, c_sc, loss_sc, *, n_layers, hidden):
    """Fused decoder: multi-layer LSTM + projection + CE; grid = (T_y + 1,).

    t == 0 is the SOS warm-up step (hidden state update only, no loss).
    """
    t = pl.program_id(0)

    @pl.when(t == 0)
    def _init():
        h_sc[...] = h0_ref[...]
        c_sc[...] = c0_ref[...]
        loss_sc[...] = jnp.zeros_like(loss_sc)

    x = None
    gates_in = xg0_ref[...]                        # (B, 4H) layer-0 input gates (+bias)
    for l in range(n_layers):
        h = h_sc[l]
        c = c_sc[l]
        if l > 0:
            gates_in = (jnp.dot(x.astype(jnp.bfloat16), wih_ref[l],
                                preferred_element_type=jnp.float32)
                        + b_ref[l])
        gates = gates_in + jnp.dot(h.astype(jnp.bfloat16), whh_ref[l],
                                   preferred_element_type=jnp.float32)
        lane = lax.broadcasted_iota(jnp.int32, gates.shape, 1)
        use_tanh = (lane >= 2 * hidden) & (lane < 3 * hidden)
        act = jnp.where(use_tanh, jnp.tanh(gates), jax.nn.sigmoid(gates))
        i_g = act[:, 0 * hidden:1 * hidden]
        f_g = act[:, 1 * hidden:2 * hidden]
        g_g = act[:, 2 * hidden:3 * hidden]
        o_g = act[:, 3 * hidden:4 * hidden]
        c_new = f_g * c + i_g * g_g
        h_new = o_g * jnp.tanh(c_new)
        h_sc[l] = h_new
        c_sc[l] = c_new
        x = h_new

    @pl.when(t >= 1)
    def _loss_step():
        logits = (jnp.dot(x.astype(jnp.bfloat16), wout_ref[...],
                          preferred_element_type=jnp.float32)
                  + bout_ref[...])                             # (B, V)
        m = jnp.max(logits, axis=-1, keepdims=True)
        lse = m + jnp.log(jnp.sum(jnp.exp(logits - m), axis=-1, keepdims=True))
        tgt = jnp.sum(logits * onehot_ref[...], axis=-1, keepdims=True)
        loss_sc[...] = loss_sc[...] + (lse - tgt)

    @pl.when(t == pl.num_programs(0) - 1)
    def _fin():
        loss_ref[...] = loss_sc[...]


def decode_with_loss(xg0, dec_wih, dec_whh, dec_b, h0, c0, onehot, wout, bout,
                     *, n_layers, hidden, vocab):
    Td, B, G = xg0.shape
    L, H, V = n_layers, hidden, vocab
    kernel = functools.partial(_decoder_kernel, n_layers=L, hidden=H)
    return pl.pallas_call(
        kernel,
        grid=(Td,),
        in_specs=[
            pl.BlockSpec((None, B, G), lambda t: (t, 0, 0)),   # layer-0 x-gates
            pl.BlockSpec((L, H, G), lambda t: (0, 0, 0)),      # W_ih^T stack
            pl.BlockSpec((L, H, G), lambda t: (0, 0, 0)),      # W_hh^T stack
            pl.BlockSpec((L, 1, G), lambda t: (0, 0, 0)),      # biases
            pl.BlockSpec((L, B, H), lambda t: (0, 0, 0)),      # h0 (encoder final)
            pl.BlockSpec((L, B, H), lambda t: (0, 0, 0)),      # c0
            pl.BlockSpec((None, B, V), lambda t: (t, 0, 0)),   # target one-hot
            pl.BlockSpec((H, V), lambda t: (0, 0)),            # W_out^T resident
            pl.BlockSpec((1, V), lambda t: (0, 0)),            # b_out resident
        ],
        out_specs=pl.BlockSpec((B, 1), lambda t: (0, 0)),
        out_shape=jax.ShapeDtypeStruct((B, 1), jnp.float32),
        scratch_shapes=[pltpu.VMEM((L, B, H), jnp.float32),
                        pltpu.VMEM((L, B, H), jnp.float32),
                        pltpu.VMEM((B, 1), jnp.float32)],
        compiler_params=pltpu.CompilerParams(dimension_semantics=("arbitrary",)),
    )(xg0, dec_wih, dec_whh, dec_b, h0, c0, onehot, wout, bout)


# ------------------------------- model glue --------------------------------

@functools.partial(jax.jit,
                   static_argnames=("sos_idx", "n_layers", "hidden", "vocab"))
def seq2seq_forward(x_tokens, y_tokens, lengths, params, *,
                    sos_idx, n_layers, hidden, vocab):
    B = x_tokens.shape[0]
    # pad batch to a multiple of 8 (f32 sublane); padded rows are sliced off at the end
    B_pad = -(-B // 8) * 8
    pad = B_pad - B
    if pad:
        x_tokens = jnp.pad(x_tokens, ((0, pad), (0, 0)))
        y_tokens = jnp.pad(y_tokens, ((0, pad), (0, 0)))
        lengths_p = jnp.pad(lengths, (0, pad), constant_values=1)
    else:
        lengths_p = lengths

    embed = params["embed"]

    # ---- encoder: per-layer fused recurrent kernel, W_ih projection hoisted ----
    emb = embed[x_tokens]                                      # (B_pad, T_x, H)
    len2d = lengths_p[:, None].astype(jnp.int32)               # (B_pad, 1)
    layer_in = emb
    h_list, c_list = [], []
    for l in range(n_layers):
        wih_t, whh_bf, b = params["enc"][l]
        xg = jnp.einsum("btd,dg->btg", layer_in, wih_t) + b    # one big matmul
        xg_t = jnp.transpose(xg, (1, 0, 2))                    # (T, B_pad, 4H)
        seq_out, h_l, c_l = lstm_layer(xg_t, whh_bf, len2d, hidden)
        layer_in = jnp.transpose(seq_out, (1, 0, 2))           # (B_pad, T, H)
        h_list.append(h_l)
        c_list.append(c_l)
    h_stack = jnp.stack(h_list)                                # (L, B_pad, H)
    c_stack = jnp.stack(c_list)
    # (reference permute(1,0,2).reshape(...).permute(1,0,2) is the identity for
    #  the unidirectional case)

    # ---- decoder: single fused kernel over SOS warm-up + T_y teacher steps ----
    sos_col = jnp.full((B_pad, 1), sos_idx, y_tokens.dtype)
    dec_tokens = jnp.concatenate([sos_col, y_tokens], axis=1)  # (B_pad, T_y+1)
    dec_emb = embed[dec_tokens]                                # (B_pad, T_y+1, H)
    # hoist layer-0 input projection over the full target sequence
    xg0 = (jnp.einsum("btd,dg->btg", dec_emb,
                      params["dec_wih"][0].astype(jnp.float32))
           + params["dec_b"][0])                               # (B_pad, T_y+1, 4H)
    xg0 = jnp.transpose(xg0, (1, 0, 2))                        # (T_y+1, B_pad, 4H)
    # per-step CE targets (= token just fed, matching the reference); t=0 unused
    onehot = jnp.transpose(jax.nn.one_hot(dec_tokens, vocab, dtype=jnp.float32),
                           (1, 0, 2))                          # (T_y+1, B_pad, V)

    loss_vec = decode_with_loss(xg0, params["dec_wih"], params["dec_whh"],
                                params["dec_b"], h_stack, c_stack, onehot,
                                params["W_t"], params["W_b"],
                                n_layers=n_layers, hidden=hidden, vocab=vocab)

    # ---- normalize_loss (per-row sum / encoder length, mean over real rows) ----
    loss_rows = loss_vec[:B, 0] / lengths.astype(jnp.float32)
    return loss_rows.mean()


# ------------------------------ param init ---------------------------------

def init_params(key, vocab, hidden, n_layers):
    H, V, L = hidden, vocab, n_layers
    keys = jax.random.split(key, 6 * L + 3)

    def nrm(k, shape):
        return jax.random.normal(k, shape, jnp.float32) * 0.1

    idx = 0
    embed = nrm(keys[idx], (V, H)); idx += 1

    enc = []
    for _ in range(L):
        wih = nrm(keys[idx], (H, 4 * H)); idx += 1             # W_ih^T (hoisted matmul)
        whh = nrm(keys[idx], (H, 4 * H)); idx += 1             # W_hh^T (kernel, bf16)
        b = nrm(keys[idx], (1, 4 * H)); idx += 1               # b_ih + b_hh
        enc.append((wih, whh.astype(jnp.bfloat16), b))

    dec_wih, dec_whh, dec_b = [], [], []
    for _ in range(L):
        dec_wih.append(nrm(keys[idx], (H, 4 * H))); idx += 1
        dec_whh.append(nrm(keys[idx], (H, 4 * H))); idx += 1
        dec_b.append(nrm(keys[idx], (1, 4 * H))); idx += 1

    W_t = nrm(keys[idx], (H, V)); idx += 1                     # Linear weight^T
    W_b = nrm(keys[idx], (1, V)); idx += 1                     # Linear bias

    return {
        "embed": embed,
        "enc": enc,
        "dec_wih": jnp.stack(dec_wih).astype(jnp.bfloat16),    # (L, H, 4H)
        "dec_whh": jnp.stack(dec_whh).astype(jnp.bfloat16),    # (L, H, 4H)
        "dec_b": jnp.stack(dec_b),                             # (L, 1, 4H)
        "W_t": W_t.astype(jnp.bfloat16),                       # (H, V)
        "W_b": W_b,                                            # (1, V)
    }


# --------------------------------- main -------------------------------------

if __name__ == "__main__":
    B, T_x, T_y = 2, 8, 6
    hidden = 32
    n_layers = 2
    base_vocab = 125                       # embeddings.shape[0]
    vocab = base_vocab + 3                 # + SOS / EOS / PAD  -> 128
    SOS_idx, EOS_idx, PAD_idx = 125, 126, 127

    key = jax.random.PRNGKey(0)
    pkey, xkey, ykey = jax.random.split(key, 3)

    params = init_params(pkey, vocab, hidden, n_layers)
    x = jax.random.randint(xkey, (B, T_x), 0, base_vocab, jnp.int32)
    y = jax.random.randint(ykey, (B, T_y), 0, base_vocab, jnp.int32)
    lengths = jnp.array([T_x, T_x - 3], jnp.int32)

    loss = seq2seq_forward(x, y, lengths, params,
                           sos_idx=SOS_idx, n_layers=n_layers,
                           hidden=hidden, vocab=vocab)
    jax.block_until_ready(loss)
    assert loss.shape == () and jnp.isfinite(loss)
    print("KERNEL_OK")
</pallas_src>

<mosaic_0001>
module attributes {stable_mosaic.version = 11 : i64} {
  func.func @_lstm_layer_kernel(%arg0: i32, %arg1: memref<1x8x128xf32, #tpu.memory_space<vmem>>, %arg2: memref<32x128xbf16, #tpu.memory_space<vmem>>, %arg3: memref<8x1xi32, #tpu.memory_space<vmem>>, %arg4: memref<1x8x32xf32, #tpu.memory_space<vmem>>, %arg5: memref<8x32xf32, #tpu.memory_space<vmem>>, %arg6: memref<8x32xf32, #tpu.memory_space<vmem>>, %arg7: memref<8x32xf32, #tpu.memory_space<vmem>>, %arg8: memref<8x32xf32, #tpu.memory_space<vmem>>) attributes {dimension_semantics = [#tpu.dimension_semantics<arbitrary>], iteration_bounds = array<i64: 8>, scalar_prefetch = 0 : i64, scratch_operands = 2 : i64, tpu.core_type = #tpu.core_type<tc>, window_params = [{transform_indices = @transform_0, window_bounds = array<i64: 1, 8, 128>}, {pipeline_mode = #tpu.pipeline_mode<synchronous>, transform_indices = @transform_1, window_bounds = array<i64: 32, 128>}, {pipeline_mode = #tpu.pipeline_mode<synchronous>, transform_indices = @transform_2, window_bounds = array<i64: 8, 1>}, {transform_indices = @transform_3, window_bounds = array<i64: 1, 8, 32>}, {pipeline_mode = #tpu.pipeline_mode<synchronous>, transform_indices = @transform_4, window_bounds = array<i64: 8, 32>}, {pipeline_mode = #tpu.pipeline_mode<synchronous>, transform_indices = @transform_5, window_bounds = array<i64: 8, 32>}]} {
    %c0_i32 = arith.constant 0 : i32
    %0 = arith.cmpi eq, %arg0, %c0_i32 : i32
    %1 = arith.extui %0 : i1 to i32
    %c0_i32_0 = arith.constant 0 : i32
    %2 = arith.cmpi ne, %1, %c0_i32_0 : i32
    scf.if %2 {
      %cst_20 = arith.constant 0.000000e+00 : f32
      %50 = vector.broadcast %cst_20 : f32 to vector<8x32xf32>
      %c0_21 = arith.constant 0 : index
      %c0_22 = arith.constant 0 : index
      %51 = vector.load %arg7[%c0_21, %c0_22] : memref<8x32xf32, #tpu.memory_space<vmem>>, vector<8x32xf32>
      tpu.vector_store %arg7[%c0_21, %c0_22], %50 {strides = array<i32>} : memref<8x32xf32, #tpu.memory_space<vmem>>, vector<8x32xf32>,
      %cst_23 = arith.constant 0.000000e+00 : f32
      %52 = vector.broadcast %cst_23 : f32 to vector<8x32xf32>
      %c0_24 = arith.constant 0 : index
      %c0_25 = arith.constant 0 : index
      %53 = vector.load %arg8[%c0_24, %c0_25] : memref<8x32xf32, #tpu.memory_space<vmem>>, vector<8x32xf32>
      tpu.vector_store %arg8[%c0_24, %c0_25], %52 {strides = array<i32>} : memref<8x32xf32, #tpu.memory_space<vmem>>, vector<8x32xf32>,
    } else {
    }
    %c0 = arith.constant 0 : index
    %c0_1 = arith.constant 0 : index
    %3 = vector.load %arg7[%c0, %c0_1] : memref<8x32xf32, #tpu.memory_space<vmem>>, vector<8x32xf32>
    %c0_2 = arith.constant 0 : index
    %c0_3 = arith.constant 0 : index
    %4 = vector.load %arg8[%c0_2, %c0_3] : memref<8x32xf32, #tpu.memory_space<vmem>>, vector<8x32xf32>
    %c0_4 = arith.constant 0 : index
    %c0_5 = arith.constant 0 : index
    %c0_6 = arith.constant 0 : index
    %5 = vector.load %arg1[%c0_4, %c0_5, %c0_6] : memref<1x8x128xf32, #tpu.memory_space<vmem>>, vector<1x8x128xf32>
    %6 = vector.shape_cast %5 : vector<1x8x128xf32> to vector<8x128xf32>
    %7 = arith.truncf %3 : vector<8x32xf32> to vector<8x32xbf16>
    %c0_7 = arith.constant 0 : index
    %c0_8 = arith.constant 0 : index
    %8 = vector.load %arg2[%c0_7, %c0_8] : memref<32x128xbf16, #tpu.memory_space<vmem>>, vector<32x128xbf16>
    %cst = arith.constant dense<0.000000e+00> : vector<8x128xf32>
    %9 = tpu.matmul %7, %8, %cst {dimension_numbers = #tpu.dot_dimension_numbers<[1], [0], [0], [1], [0, 0, 1, 1], [], []>} : vector<8x32xbf16>, vector<32x128xbf16>, vector<8x128xf32> -> vector<8x128xf32>
    %10 = arith.addf %6, %9 : vector<8x128xf32>
    %11 = tpu.iota {dimensions = array<i32: 1>} : vector<8x128xi32>
    %c64_i32 = arith.constant 64 : i32
    %12 = vector.broadcast %c64_i32 : i32 to vector<8x128xi32>
    %13 = arith.cmpi sge, %11, %12 : vector<8x128xi32>
    %c96_i32 = arith.constant 96 : i32
    %14 = vector.broadcast %c96_i32 : i32 to vector<8x128xi32>
    %15 = arith.cmpi slt, %11, %14 : vector<8x128xi32>
    %16 = arith.andi %13, %15 : vector<8x128xi1>
    %17 = math.tanh %10 : vector<8x128xf32>
    %18 = arith.negf %10 : vector<8x128xf32>
    %19 = math.exp %18 : vector<8x128xf32>
    %cst_9 = arith.constant 1.000000e+00 : f32
    %20 = vector.broadcast %cst_9 : f32 to vector<8x128xf32>
    %21 = arith.addf %20, %19 : vector<8x128xf32>
    %22 = arith.divf %20, %21 : vector<8x128xf32>
    %23 = arith.select %16, %17, %22 : vector<8x128xi1>, vector<8x128xf32>
    %24 = vector.extract_strided_slice %23 {offsets = [0, 0], sizes = [8, 32], strides = [1, 1]} : vector<8x128xf32> to vector<8x32xf32>
    %25 = vector.extract_strided_slice %23 {offsets = [0, 32], sizes = [8, 32], strides = [1, 1]} : vector<8x128xf32> to vector<8x32xf32>
    %26 = vector.extract_strided_slice %23 {offsets = [0, 64], sizes = [8, 32], strides = [1, 1]} : vector<8x128xf32> to vector<8x32xf32>
    %27 = vector.extract_strided_slice %23 {offsets = [0, 96], sizes = [8, 32], strides = [1, 1]} : vector<8x128xf32> to vector<8x32xf32>
    %28 = arith.mulf %25, %4 : vector<8x32xf32>
    %29 = arith.mulf %24, %26 : vector<8x32xf32>
    %30 = arith.addf %28, %29 : vector<8x32xf32>
    %31 = math.tanh %30 : vector<8x32xf32>
    %32 = arith.mulf %27, %31 : vector<8x32xf32>
    %c0_10 = arith.constant 0 : index
    %c0_11 = arith.constant 0 : index
    %33 = vector.load %arg3[%c0_10, %c0_11] : memref<8x1xi32, #tpu.memory_space<vmem>>, vector<8x1xi32>
    %34 = vector.broadcast %arg0 : i32 to vector<8x1xi32>
    %35 = arith.cmpi slt, %34, %33 : vector<8x1xi32>
    %36 = vector.shape_cast %35 : vector<8x1xi1> to vector<8x1xi1>
    %37 = vector.broadcast %36 : vector<8x1xi1> to vector<8x32xi1>
    %38 = arith.select %37, %32, %3 : vector<8x32xi1>, vector<8x32xf32>
    %39 = vector.shape_cast %35 : vector<8x1xi1> to vector<8x1xi1>
    %40 = vector.broadcast %39 : vector<8x1xi1> to vector<8x32xi1>
    %41 = arith.select %40, %30, %4 : vector<8x32xi1>, vector<8x32xf32>
    %c0_12 = arith.constant 0 : index
    %c0_13 = arith.constant 0 : index
    %42 = vector.load %arg7[%c0_12, %c0_13] : memref<8x32xf32, #tpu.memory_space<vmem>>, vector<8x32xf32>
    tpu.vector_store %arg7[%c0_12, %c0_13], %38 {strides = array<i32>} : memref<8x32xf32, #tpu.memory_space<vmem>>, vector<8x32xf32>,
    %c0_14 = arith.constant 0 : index
    %c0_15 = arith.constant 0 : index
    %43 = vector.load %arg8[%c0_14, %c0_15] : memref<8x32xf32, #tpu.memory_space<vmem>>, vector<8x32xf32>
    tpu.vector_store %arg8[%c0_14, %c0_15], %41 {strides = array<i32>} : memref<8x32xf32, #tpu.memory_space<vmem>>, vector<8x32xf32>,
    %c0_16 = arith.constant 0 : index
    %c0_17 = arith.constant 0 : index
    %c0_18 = arith.constant 0 : index
    %44 = vector.load %arg4[%c0_16, %c0_17, %c0_18] : memref<1x8x32xf32, #tpu.memory_space<vmem>>, vector<1x8x32xf32>
    %45 = vector.shape_cast %44 : vector<1x8x32xf32> to vector<8x32xf32>
    %46 = vector.shape_cast %38 : vector<8x32xf32> to vector<1x8x32xf32>
    tpu.vector_store %arg4[%c0_16, %c0_17, %c0_18], %46 {strides = array<i32>} : memref<1x8x32xf32, #tpu.memory_space<vmem>>, vector<1x8x32xf32>,
    %c7_i32 = arith.constant 7 : i32
    %47 = arith.cmpi eq, %arg0, %c7_i32 : i32
    %48 = arith.extui %47 : i1 to i32
    %c0_i32_19 = arith.constant 0 : i32
    %49 = arith.cmpi ne, %48, %c0_i32_19 : i32
    scf.if %49 {
      %c0_20 = arith.constant 0 : index
      %c0_21 = arith.constant 0 : index
      %50 = vector.load %arg5[%c0_20, %c0_21] : memref<8x32xf32, #tpu.memory_space<vmem>>, vector<8x32xf32>
      tpu.vector_store %arg5[%c0_20, %c0_21], %38 {strides = array<i32>} : memref<8x32xf32, #tpu.memory_space<vmem>>, vector<8x32xf32>,
      %c0_22 = arith.constant 0 : index
      %c0_23 = arith.constant 0 : index
      %51 = vector.load %arg6[%c0_22, %c0_23] : memref<8x32xf32, #tpu.memory_space<vmem>>, vector<8x32xf32>
      tpu.vector_store %arg6[%c0_22, %c0_23], %41 {strides = array<i32>} : memref<8x32xf32, #tpu.memory_space<vmem>>, vector<8x32xf32>,
    } else {
    }
    return
  }
  func.func @transform_0(%arg0: i32) -> (i32, i32, i32) {
    %c0_i32 = arith.constant 0 : i32
    %c0_i32_0 = arith.constant 0 : i32
    %c0_i32_1 = arith.constant 0 : i32
    return %arg0, %c0_i32, %c0_i32_0 : i32, i32, i32
  }
  func.func @transform_1(%arg0: i32) -> (i32, i32) {
    %c0_i32 = arith.constant 0 : i32
    %c0_i32_0 = arith.constant 0 : i32
    %c0_i32_1 = arith.constant 0 : i32
    return %c0_i32, %c0_i32_0 : i32, i32
  }
  func.func @transform_2(%arg0: i32) -> (i32, i32) {
    %c0_i32 = arith.constant 0 : i32
    %c0_i32_0 = arith.constant 0 : i32
    %c0_i32_1 = arith.constant 0 : i32
    return %c0_i32, %c0_i32_0 : i32, i32
  }
  func.func @transform_3(%arg0: i32) -> (i32, i32, i32) {
    %c0_i32 = arith.constant 0 : i32
    %c0_i32_0 = arith.constant 0 : i32
    %c0_i32_1 = arith.constant 0 : i32
    return %arg0, %c0_i32, %c0_i32_0 : i32, i32, i32
  }
  func.func @transform_4(%arg0: i32) -> (i32, i32) {
    %c0_i32 = arith.constant 0 : i32
    %c0_i32_0 = arith.constant 0 : i32
    %c0_i32_1 = arith.constant 0 : i32
    return %c0_i32, %c0_i32_0 : i32, i32
  }
  func.func @transform_5(%arg0: i32) -> (i32, i32) {
    %c0_i32 = arith.constant 0 : i32
    %c0_i32_0 = arith.constant 0 : i32
    %c0_i32_1 = arith.constant 0 : i32
    return %c0_i32, %c0_i32_0 : i32, i32
  }
}

module attributes {stable_mosaic.version = 11 : i64} {
  func.func @_lstm_layer_kernel(%arg0: i32, %arg1: memref<1x8x128xf32, #tpu.memory_space<vmem>>, %arg2: memref<32x128xbf16, #tpu.memory_space<vmem>>, %arg3: memref<8x1xi32, #tpu.memory_space<vmem>>, %arg4: memref<1x8x32xf32, #tpu.memory_space<vmem>>, %arg5: memref<8x32xf32, #tpu.memory_space<vmem>>, %arg6: memref<8x32xf32, #tpu.memory_space<vmem>>, %arg7: memref<8x32xf32, #tpu.memory_space<vmem>>, %arg8: memref<8x32xf32, #tpu.memory_space<vmem>>) attributes {dimension_semantics = [#tpu.dimension_semantics<arbitrary>], iteration_bounds = array<i64: 8>, scalar_prefetch = 0 : i64, scratch_operands = 2 : i64, tpu.core_type = #tpu.core_type<tc>, window_params = [{transform_indices = @transform_0, window_bounds = array<i64: 1, 8, 128>}, {pipeline_mode = #tpu.pipeline_mode<synchronous>, transform_indices = @transform_1, window_bounds = array<i64: 32, 128>}, {pipeline_mode = #tpu.pipeline_mode<synchronous>, transform_indices = @transform_2, window_bounds = array<i64: 8, 1>}, {transform_indices = @transform_3, window_bounds = array<i64: 1, 8, 32>}, {pipeline_mode = #tpu.pipeline_mode<synchronous>, transform_indices = @transform_4, window_bounds = array<i64: 8, 32>}, {pipeline_mode = #tpu.pipeline_mode<synchronous>, transform_indices = @transform_5, window_bounds = array<i64: 8, 32>}]} {
    %c0_i32 = arith.constant 0 : i32
    %0 = arith.cmpi eq, %arg0, %c0_i32 : i32
    %1 = arith.extui %0 : i1 to i32
    %c0_i32_0 = arith.constant 0 : i32
    %2 = arith.cmpi ne, %1, %c0_i32_0 : i32
    scf.if %2 {
      %cst_20 = arith.constant 0.000000e+00 : f32
      %50 = vector.broadcast %cst_20 : f32 to vector<8x32xf32>
      %c0_21 = arith.constant 0 : index
      %c0_22 = arith.constant 0 : index
      %51 = vector.load %arg7[%c0_21, %c0_22] : memref<8x32xf32, #tpu.memory_space<vmem>>, vector<8x32xf32>
      tpu.vector_store %arg7[%c0_21, %c0_22], %50 {strides = array<i32>} : memref<8x32xf32, #tpu.memory_space<vmem>>, vector<8x32xf32>,
      %cst_23 = arith.constant 0.000000e+00 : f32
      %52 = vector.broadcast %cst_23 : f32 to vector<8x32xf32>
      %c0_24 = arith.constant 0 : index
      %c0_25 = arith.constant 0 : index
      %53 = vector.load %arg8[%c0_24, %c0_25] : memref<8x32xf32, #tpu.memory_space<vmem>>, vector<8x32xf32>
      tpu.vector_store %arg8[%c0_24, %c0_25], %52 {strides = array<i32>} : memref<8x32xf32, #tpu.memory_space<vmem>>, vector<8x32xf32>,
    } else {
    }
    %c0 = arith.constant 0 : index
    %c0_1 = arith.constant 0 : index
    %3 = vector.load %arg7[%c0, %c0_1] : memref<8x32xf32, #tpu.memory_space<vmem>>, vector<8x32xf32>
    %c0_2 = arith.constant 0 : index
    %c0_3 = arith.constant 0 : index
    %4 = vector.load %arg8[%c0_2, %c0_3] : memref<8x32xf32, #tpu.memory_space<vmem>>, vector<8x32xf32>
    %c0_4 = arith.constant 0 : index
    %c0_5 = arith.constant 0 : index
    %c0_6 = arith.constant 0 : index
    %5 = vector.load %arg1[%c0_4, %c0_5, %c0_6] : memref<1x8x128xf32, #tpu.memory_space<vmem>>, vector<1x8x128xf32>
    %6 = vector.shape_cast %5 : vector<1x8x128xf32> to vector<8x128xf32>
    %7 = arith.truncf %3 : vector<8x32xf32> to vector<8x32xbf16>
    %c0_7 = arith.constant 0 : index
    %c0_8 = arith.constant 0 : index
    %8 = vector.load %arg2[%c0_7, %c0_8] : memref<32x128xbf16, #tpu.memory_space<vmem>>, vector<32x128xbf16>
    %cst = arith.constant dense<0.000000e+00> : vector<8x128xf32>
    %9 = tpu.matmul %7, %8, %cst {dimension_numbers = #tpu.dot_dimension_numbers<[1], [0], [0], [1], [0, 0, 1, 1], [], []>} : vector<8x32xbf16>, vector<32x128xbf16>, vector<8x128xf32> -> vector<8x128xf32>
    %10 = arith.addf %6, %9 : vector<8x128xf32>
    %11 = tpu.iota {dimensions = array<i32: 1>} : vector<8x128xi32>
    %c64_i32 = arith.constant 64 : i32
    %12 = vector.broadcast %c64_i32 : i32 to vector<8x128xi32>
    %13 = arith.cmpi sge, %11, %12 : vector<8x128xi32>
    %c96_i32 = arith.constant 96 : i32
    %14 = vector.broadcast %c96_i32 : i32 to vector<8x128xi32>
    %15 = arith.cmpi slt, %11, %14 : vector<8x128xi32>
    %16 = arith.andi %13, %15 : vector<8x128xi1>
    %17 = math.tanh %10 : vector<8x128xf32>
    %18 = arith.negf %10 : vector<8x128xf32>
    %19 = math.exp %18 : vector<8x128xf32>
    %cst_9 = arith.constant 1.000000e+00 : f32
    %20 = vector.broadcast %cst_9 : f32 to vector<8x128xf32>
    %21 = arith.addf %20, %19 : vector<8x128xf32>
    %22 = arith.divf %20, %21 : vector<8x128xf32>
    %23 = arith.select %16, %17, %22 : vector<8x128xi1>, vector<8x128xf32>
    %24 = vector.extract_strided_slice %23 {offsets = [0, 0], sizes = [8, 32], strides = [1, 1]} : vector<8x128xf32> to vector<8x32xf32>
    %25 = vector.extract_strided_slice %23 {offsets = [0, 32], sizes = [8, 32], strides = [1, 1]} : vector<8x128xf32> to vector<8x32xf32>
    %26 = vector.extract_strided_slice %23 {offsets = [0, 64], sizes = [8, 32], strides = [1, 1]} : vector<8x128xf32> to vector<8x32xf32>
    %27 = vector.extract_strided_slice %23 {offsets = [0, 96], sizes = [8, 32], strides = [1, 1]} : vector<8x128xf32> to vector<8x32xf32>
    %28 = arith.mulf %25, %4 : vector<8x32xf32>
    %29 = arith.mulf %24, %26 : vector<8x32xf32>
    %30 = arith.addf %28, %29 : vector<8x32xf32>
    %31 = math.tanh %30 : vector<8x32xf32>
    %32 = arith.mulf %27, %31 : vector<8x32xf32>
    %c0_10 = arith.constant 0 : index
    %c0_11 = arith.constant 0 : index
    %33 = vector.load %arg3[%c0_10, %c0_11] : memref<8x1xi32, #tpu.memory_space<vmem>>, vector<8x1xi32>
    %34 = vector.broadcast %arg0 : i32 to vector<8x1xi32>
    %35 = arith.cmpi slt, %34, %33 : vector<8x1xi32>
    %36 = vector.shape_cast %35 : vector<8x1xi1> to vector<8x1xi1>
    %37 = vector.broadcast %36 : vector<8x1xi1> to vector<8x32xi1>
    %38 = arith.select %37, %32, %3 : vector<8x32xi1>, vector<8x32xf32>
    %39 = vector.shape_cast %35 : vector<8x1xi1> to vector<8x1xi1>
    %40 = vector.broadcast %39 : vector<8x1xi1> to vector<8x32xi1>
    %41 = arith.select %40, %30, %4 : vector<8x32xi1>, vector<8x32xf32>
    %c0_12 = arith.constant 0 : index
    %c0_13 = arith.constant 0 : index
    %42 = vector.load %arg7[%c0_12, %c0_13] : memref<8x32xf32, #tpu.memory_space<vmem>>, vector<8x32xf32>
    tpu.vector_store %arg7[%c0_12, %c0_13], %38 {strides = array<i32>} : memref<8x32xf32, #tpu.memory_space<vmem>>, vector<8x32xf32>,
    %c0_14 = arith.constant 0 : index
    %c0_15 = arith.constant 0 : index
    %43 = vector.load %arg8[%c0_14, %c0_15] : memref<8x32xf32, #tpu.memory_space<vmem>>, vector<8x32xf32>
    tpu.vector_store %arg8[%c0_14, %c0_15], %41 {strides = array<i32>} : memref<8x32xf32, #tpu.memory_space<vmem>>, vector<8x32xf32>,
    %c0_16 = arith.constant 0 : index
    %c0_17 = arith.constant 0 : index
    %c0_18 = arith.constant 0 : index
    %44 = vector.load %arg4[%c0_16, %c0_17, %c0_18] : memref<1x8x32xf32, #tpu.memory_space<vmem>>, vector<1x8x32xf32>
    %45 = vector.shape_cast %44 : vector<1x8x32xf32> to vector<8x32xf32>
    %46 = vector.shape_cast %38 : vector<8x32xf32> to vector<1x8x32xf32>
    tpu.vector_store %arg4[%c0_16, %c0_17, %c0_18], %46 {strides = array<i32>} : memref<1x8x32xf32, #tpu.memory_space<vmem>>, vector<1x8x32xf32>,
    %c7_i32 = arith.constant 7 : i32
    %47 = arith.cmpi eq, %arg0, %c7_i32 : i32
    %48 = arith.extui %47 : i1 to i32
    %c0_i32_19 = arith.constant 0 : i32
    %49 = arith.cmpi ne, %48, %c0_i32_19 : i32
    scf.if %49 {
      %c0_20 = arith.constant 0 : index
      %c0_21 = arith.constant 0 : index
      %50 = vector.load %arg5[%c0_20, %c0_21] : memref<8x32xf32, #tpu.memory_space<vmem>>, vector<8x32xf32>
      tpu.vector_store %arg5[%c0_20, %c0_21], %38 {strides = array<i32>} : memref<8x32xf32, #tpu.memory_space<vmem>>, vector<8x32xf32>,
      %c0_22 = arith.constant 0 : index
      %c0_23 = arith.constant 0 : index
      %51 = vector.load %arg6[%c0_22, %c0_23] : memref<8x32xf32, #tpu.memory_space<vmem>>, vector<8x32xf32>
      tpu.vector_store %arg6[%c0_22, %c0_23], %41 {strides = array<i32>} : memref<8x32xf32, #tpu.memory_space<vmem>>, vector<8x32xf32>,
    } else {
    }
    return
  }
  func.func @transform_0(%arg0: i32) -> (i32, i32, i32) {
    %c0_i32 = arith.constant 0 : i32
    %c0_i32_0 = arith.constant 0 : i32
    %c0_i32_1 = arith.constant 0 : i32
    return %arg0, %c0_i32, %c0_i32_0 : i32, i32, i32
  }
  func.func @transform_1(%arg0: i32) -> (i32, i32) {
    %c0_i32 = arith.constant 0 : i32
    %c0_i32_0 = arith.constant 0 : i32
    %c0_i32_1 = arith.constant 0 : i32
    return %c0_i32, %c0_i32_0 : i32, i32
  }
  func.func @transform_2(%arg0: i32) -> (i32, i32) {
    %c0_i32 = arith.constant 0 : i32
    %c0_i32_0 = arith.constant 0 : i32
    %c0_i32_1 = arith.constant 0 : i32
    return %c0_i32, %c0_i32_0 : i32, i32
  }
  func.func @transform_3(%arg0: i32) -> (i32, i32, i32) {
    %c0_i32 = arith.constant 0 : i32
    %c0_i32_0 = arith.constant 0 : i32
    %c0_i32_1 = arith.constant 0 : i32
    return %arg0, %c0_i32, %c0_i32_0 : i32, i32, i32
  }
  func.func @transform_4(%arg0: i32) -> (i32, i32) {
    %c0_i32 = arith.constant 0 : i32
    %c0_i32_0 = arith.constant 0 : i32
    %c0_i32_1 = arith.constant 0 : i32
    return %c0_i32, %c0_i32_0 : i32, i32
  }
  func.func @transform_5(%arg0: i32) -> (i32, i32) {
    %c0_i32 = arith.constant 0 : i32
    %c0_i32_0 = arith.constant 0 : i32
    %c0_i32_1 = arith.constant 0 : i32
    return %c0_i32, %c0_i32_0 : i32, i32
  }
}

module attributes {stable_mosaic.version = 11 : i64} {
  func.func @_decoder_kernel(%arg0: i32, %arg1: memref<1x8x128xf32, #tpu.memory_space<vmem>>, %arg2: memref<2x32x128xbf16, #tpu.memory_space<vmem>>, %arg3: memref<2x32x128xbf16, #tpu.memory_space<vmem>>, %arg4: memref<2x1x128xf32, #tpu.memory_space<vmem>>, %arg5: memref<2x8x32xf32, #tpu.memory_space<vmem>>, %arg6: memref<2x8x32xf32, #tpu.memory_space<vmem>>, %arg7: memref<1x8x128xf32, #tpu.memory_space<vmem>>, %arg8: memref<32x128xbf16, #tpu.memory_space<vmem>>, %arg9: memref<1x128xf32, #tpu.memory_space<vmem>>, %arg10: memref<8x1xf32, #tpu.memory_space<vmem>>, %arg11: memref<2x8x32xf32, #tpu.memory_space<vmem>>, %arg12: memref<2x8x32xf32, #tpu.memory_space<vmem>>, %arg13: memref<8x1xf32, #tpu.memory_space<vmem>>) attributes {dimension_semantics = [#tpu.dimension_semantics<arbitrary>], iteration_bounds = array<i64: 7>, scalar_prefetch = 0 : i64, scratch_operands = 3 : i64, tpu.core_type = #tpu.core_type<tc>, window_params = [{transform_indices = @transform_0, window_bounds = array<i64: 1, 8, 128>}, {pipeline_mode = #tpu.pipeline_mode<synchronous>, transform_indices = @transform_1, window_bounds = array<i64: 2, 32, 128>}, {pipeline_mode = #tpu.pipeline_mode<synchronous>, transform_indices = @transform_2, window_bounds = array<i64: 2, 32, 128>}, {pipeline_mode = #tpu.pipeline_mode<synchronous>, transform_indices = @transform_3, window_bounds = array<i64: 2, 1, 128>}, {pipeline_mode = #tpu.pipeline_mode<synchronous>, transform_indices = @transform_4, window_bounds = array<i64: 2, 8, 32>}, {pipeline_mode = #tpu.pipeline_mode<synchronous>, transform_indices = @transform_5, window_bounds = array<i64: 2, 8, 32>}, {transform_indices = @transform_6, window_bounds = array<i64: 1, 8, 128>}, {pipeline_mode = #tpu.pipeline_mode<synchronous>, transform_indices = @transform_7, window_bounds = array<i64: 32, 128>}, {pipeline_mode = #tpu.pipeline_mode<synchronous>, transform_indices = @transform_8, window_bounds = array<i64: 1, 128>}, {pipeline_mode = #tpu.pipeline_mode<synchronous>, transform_indices = @transform_9, window_bounds = array<i64: 8, 1>}]} {
    %c0_i32 = arith.constant 0 : i32
    %0 = arith.cmpi eq, %arg0, %c0_i32 : i32
    %1 = arith.extui %0 : i1 to i32
    %c0_i32_0 = arith.constant 0 : i32
    %2 = arith.cmpi ne, %1, %c0_i32_0 : i32
    scf.if %2 {
      %c0_46 = arith.constant 0 : index
      %c0_47 = arith.constant 0 : index
      %c0_48 = arith.constant 0 : index
      %93 = vector.load %arg5[%c0_46, %c0_47, %c0_48] : memref<2x8x32xf32, #tpu.memory_space<vmem>>, vector<2x8x32xf32>
      %c0_49 = arith.constant 0 : index
      %c0_50 = arith.constant 0 : index
      %c0_51 = arith.constant 0 : index
      %94 = vector.load %arg11[%c0_49, %c0_50, %c0_51] : memref<2x8x32xf32, #tpu.memory_space<vmem>>, vector<2x8x32xf32>
      tpu.vector_store %arg11[%c0_49, %c0_50, %c0_51], %93 {strides = array<i32>} : memref<2x8x32xf32, #tpu.memory_space<vmem>>, vector<2x8x32xf32>,
      %c0_52 = arith.constant 0 : index
      %c0_53 = arith.constant 0 : index
      %c0_54 = arith.constant 0 : index
      %95 = vector.load %arg6[%c0_52, %c0_53, %c0_54] : memref<2x8x32xf32, #tpu.memory_space<vmem>>, vector<2x8x32xf32>
      %c0_55 = arith.constant 0 : index
      %c0_56 = arith.constant 0 : index
      %c0_57 = arith.constant 0 : index
      %96 = vector.load %arg12[%c0_55, %c0_56, %c0_57] : memref<2x8x32xf32, #tpu.memory_space<vmem>>, vector<2x8x32xf32>
      tpu.vector_store %arg12[%c0_55, %c0_56, %c0_57], %95 {strides = array<i32>} : memref<2x8x32xf32, #tpu.memory_space<vmem>>, vector<2x8x32xf32>,
      %cst_58 = arith.constant 0.000000e+00 : f32
      %97 = vector.broadcast %cst_58 : f32 to vector<8x1xf32>
      %c0_59 = arith.constant 0 : index
      %c0_60 = arith.constant 0 : index
      %98 = vector.load %arg13[%c0_59, %c0_60] : memref<8x1xf32, #tpu.memory_space<vmem>>, vector<8x1xf32>
      tpu.vector_store %arg13[%c0_59, %c0_60], %97 {strides = array<i32>} : memref<8x1xf32, #tpu.memory_space<vmem>>, vector<8x1xf32>,
    } else {
    }
    %c0 = arith.constant 0 : index
    %c0_1 = arith.constant 0 : index
    %c0_2 = arith.constant 0 : index
    %3 = vector.load %arg1[%c0, %c0_1, %c0_2] : memref<1x8x128xf32, #tpu.memory_space<vmem>>, vector<1x8x128xf32>
    %4 = vector.shape_cast %3 : vector<1x8x128xf32> to vector<8x128xf32>
    %c0_3 = arith.constant 0 : index
    %c0_4 = arith.constant 0 : index
    %c0_5 = arith.constant 0 : index
    %5 = vector.load %arg11[%c0_3, %c0_4, %c0_5] : memref<2x8x32xf32, #tpu.memory_space<vmem>>, vector<1x8x32xf32>
    %6 = vector.shape_cast %5 : vector<1x8x32xf32> to vector<8x32xf32>
    %c0_6 = arith.constant 0 : index
    %c0_7 = arith.constant 0 : index
    %c0_8 = arith.constant 0 : index
    %7 = vector.load %arg12[%c0_6, %c0_7, %c0_8] : memref<2x8x32xf32, #tpu.memory_space<vmem>>, vector<1x8x32xf32>
    %8 = vector.shape_cast %7 : vector<1x8x32xf32> to vector<8x32xf32>
    %9 = arith.truncf %6 : vector<8x32xf32> to vector<8x32xbf16>
    %c0_9 = arith.constant 0 : index
    %c0_10 = arith.constant 0 : index
    %c0_11 = arith.constant 0 : index
    %10 = vector.load %arg3[%c0_9, %c0_10, %c0_11] : memref<2x32x128xbf16, #tpu.memory_space<vmem>>, vector<1x32x128xbf16>
    %11 = vector.shape_cast %10 : vector<1x32x128xbf16> to vector<32x128xbf16>
    %cst = arith.constant dense<0.000000e+00> : vector<8x128xf32>
    %12 = tpu.matmul %9, %11, %cst {dimension_numbers = #tpu.dot_dimension_numbers<[1], [0], [0], [1], [0, 0, 1, 1], [], []>} : vector<8x32xbf16>, vector<32x128xbf16>, vector<8x128xf32> -> vector<8x128xf32>
    %13 = arith.addf %4, %12 : vector<8x128xf32>
    %14 = tpu.iota {dimensions = array<i32: 1>} : vector<8x128xi32>
    %c64_i32 = arith.constant 64 : i32
    %15 = vector.broadcast %c64_i32 : i32 to vector<8x128xi32>
    %16 = arith.cmpi sge, %14, %15 : vector<8x128xi32>
    %c96_i32 = arith.constant 96 : i32
    %17 = vector.broadcast %c96_i32 : i32 to vector<8x128xi32>
    %18 = arith.cmpi slt, %14, %17 : vector<8x128xi32>
    %19 = arith.andi %16, %18 : vector<8x128xi1>
    %20 = math.tanh %13 : vector<8x128xf32>
    %21 = arith.negf %13 : vector<8x128xf32>
    %22 = math.exp %21 : vector<8x128xf32>
    %cst_12 = arith.constant 1.000000e+00 : f32
    %23 = vector.broadcast %cst_12 : f32 to vector<8x128xf32>
    %24 = arith.addf %23, %22 : vector<8x128xf32>
    %25 = arith.divf %23, %24 : vector<8x128xf32>
    %26 = arith.select %19, %20, %25 : vector<8x128xi1>, vector<8x128xf32>
    %27 = vector.extract_strided_slice %26 {offsets = [0, 0], sizes = [8, 32], strides = [1, 1]} : vector<8x128xf32> to vector<8x32xf32>
    %28 = vector.extract_strided_slice %26 {offsets = [0, 32], sizes = [8, 32], strides = [1, 1]} : vector<8x128xf32> to vector<8x32xf32>
    %29 = vector.extract_strided_slice %26 {offsets = [0, 64], sizes = [8, 32], strides = [1, 1]} : vector<8x128xf32> to vector<8x32xf32>
    %30 = vector.extract_strided_slice %26 {offsets = [0, 96], sizes = [8, 32], strides = [1, 1]} : vector<8x128xf32> to vector<8x32xf32>
    %31 = arith.mulf %28, %8 : vector<8x32xf32>
    %32 = arith.mulf %27, %29 : vector<8x32xf32>
    %33 = arith.addf %31, %32 : vector<8x32xf32>
    %34 = math.tanh %33 : vector<8x32xf32>
    %35 = arith.mulf %30, %34 : vector<8x32xf32>
    %c0_13 = arith.constant 0 : index
    %c0_14 = arith.constant 0 : index
    %c0_15 = arith.constant 0 : index
    %36 = vector.load %arg11[%c0_13, %c0_14, %c0_15] : memref<2x8x32xf32, #tpu.memory_space<vmem>>, vector<1x8x32xf32>
    %37 = vector.shape_cast %36 : vector<1x8x32xf32> to vector<8x32xf32>
    %38 = vector.shape_cast %35 : vector<8x32xf32> to vector<1x8x32xf32>
    tpu.vector_store %arg11[%c0_13, %c0_14, %c0_15], %38 {strides = array<i32>} : memref<2x8x32xf32, #tpu.memory_space<vmem>>, vector<1x8x32xf32>,
    %c0_16 = arith.constant 0 : index
    %c0_17 = arith.constant 0 : index
    %c0_18 = arith.constant 0 : index
    %39 = vector.load %arg12[%c0_16, %c0_17, %c0_18] : memref<2x8x32xf32, #tpu.memory_space<vmem>>, vector<1x8x32xf32>
    %40 = vector.shape_cast %39 : vector<1x8x32xf32> to vector<8x32xf32>
    %41 = vector.shape_cast %33 : vector<8x32xf32> to vector<1x8x32xf32>
    tpu.vector_store %arg12[%c0_16, %c0_17, %c0_18], %41 {strides = array<i32>} : memref<2x8x32xf32, #tpu.memory_space<vmem>>, vector<1x8x32xf32>,
    %c1 = arith.constant 1 : index
    %c0_19 = arith.constant 0 : index
    %c0_20 = arith.constant 0 : index
    %42 = vector.load %arg11[%c1, %c0_19, %c0_20] : memref<2x8x32xf32, #tpu.memory_space<vmem>>, vector<1x8x32xf32>
    %43 = vector.shape_cast %42 : vector<1x8x32xf32> to vector<8x32xf32>
    %c1_21 = arith.constant 1 : index
    %c0_22 = arith.constant 0 : index
    %c0_23 = arith.constant 0 : index
    %44 = vector.load %arg12[%c1_21, %c0_22, %c0_23] : memref<2x8x32xf32, #tpu.memory_space<vmem>>, vector<1x8x32xf32>
    %45 = vector.shape_cast %44 : vector<1x8x32xf32> to vector<8x32xf32>
    %46 = arith.truncf %35 : vector<8x32xf32> to vector<8x32xbf16>
    %c1_24 = arith.constant 1 : index
    %c0_25 = arith.constant 0 : index
    %c0_26 = arith.constant 0 : index
    %47 = vector.load %arg2[%c1_24, %c0_25, %c0_26] : memref<2x32x128xbf16, #tpu.memory_space<vmem>>, vector<1x32x128xbf16>
    %48 = vector.shape_cast %47 : vector<1x32x128xbf16> to vector<32x128xbf16>
    %cst_27 = arith.constant dense<0.000000e+00> : vector<8x128xf32>
    %49 = tpu.matmul %46, %48, %cst_27 {dimension_numbers = #tpu.dot_dimension_numbers<[1], [0], [0], [1], [0, 0, 1, 1], [], []>} : vector<8x32xbf16>, vector<32x128xbf16>, vector<8x128xf32> -> vector<8x128xf32>
    %c1_28 = arith.constant 1 : index
    %c0_29 = arith.constant 0 : index
    %c0_30 = arith.constant 0 : index
    %50 = vector.load %arg4[%c1_28, %c0_29, %c0_30] : memref<2x1x128xf32, #tpu.memory_space<vmem>>, vector<1x1x128xf32>
    %51 = vector.shape_cast %50 : vector<1x1x128xf32> to vector<1x128xf32>
    %52 = vector.broadcast %51 : vector<1x128xf32> to vector<8x128xf32>
    %53 = arith.addf %49, %52 : vector<8x128xf32>
    %54 = arith.truncf %43 : vector<8x32xf32> to vector<8x32xbf16>
    %c1_31 = arith.constant 1 : index
    %c0_32 = arith.constant 0 : index
    %c0_33 = arith.constant 0 : index
    %55 = vector.load %arg3[%c1_31, %c0_32, %c0_33] : memref<2x32x128xbf16, #tpu.memory_space<vmem>>, vector<1x32x128xbf16>
    %56 = vector.shape_cast %55 : vector<1x32x128xbf16> to vector<32x128xbf16>
    %cst_34 = arith.constant dense<0.000000e+00> : vector<8x128xf32>
    %57 = tpu.matmul %54, %56, %cst_34 {dimension_numbers = #tpu.dot_dimension_numbers<[1], [0], [0], [1], [0, 0, 1, 1], [], []>} : vector<8x32xbf16>, vector<32x128xbf16>, vector<8x128xf32> -> vector<8x128xf32>
    %58 = arith.addf %53, %57 : vector<8x128xf32>
    %59 = tpu.iota {dimensions = array<i32: 1>} : vector<8x128xi32>
    %c64_i32_35 = arith.constant 64 : i32
    %60 = vector.broadcast %c64_i32_35 : i32 to vector<8x128xi32>
    %61 = arith.cmpi sge, %59, %60 : vector<8x128xi32>
    %c96_i32_36 = arith.constant 96 : i32
    %62 = vector.broadcast %c96_i32_36 : i32 to vector<8x128xi32>
    %63 = arith.cmpi slt, %59, %62 : vector<8x128xi32>
    %64 = arith.andi %61, %63 : vector<8x128xi1>
    %65 = math.tanh %58 : vector<8x128xf32>
    %66 = arith.negf %58 : vector<8x128xf32>
    %67 = math.exp %66 : vector<8x128xf32>
    %cst_37 = arith.constant 1.000000e+00 : f32
    %68 = vector.broadcast %cst_37 : f32 to vector<8x128xf32>
    %69 = arith.addf %68, %67 : vector<8x128xf32>
    %70 = arith.divf %68, %69 : vector<8x128xf32>
    %71 = arith.select %64, %65, %70 : vector<8x128xi1>, vector<8x128xf32>
    %72 = vector.extract_strided_slice %71 {offsets = [0, 0], sizes = [8, 32], strides = [1, 1]} : vector<8x128xf32> to vector<8x32xf32>
    %73 = vector.extract_strided_slice %71 {offsets = [0, 32], sizes = [8, 32], strides = [1, 1]} : vector<8x128xf32> to vector<8x32xf32>
    %74 = vector.extract_strided_slice %71 {offsets = [0, 64], sizes = [8, 32], strides = [1, 1]} : vector<8x128xf32> to vector<8x32xf32>
    %75 = vector.extract_strided_slice %71 {offsets = [0, 96], sizes = [8, 32], strides = [1, 1]} : vector<8x128xf32> to vector<8x32xf32>
    %76 = arith.mulf %73, %45 : vector<8x32xf32>
    %77 = arith.mulf %72, %74 : vector<8x32xf32>
    %78 = arith.addf %76, %77 : vector<8x32xf32>
    %79 = math.tanh %78 : vector<8x32xf32>
    %80 = arith.mulf %75, %79 : vector<8x32xf32>
    %c1_38 = arith.constant 1 : index
    %c0_39 = arith.constant 0 : index
    %c0_40 = arith.constant 0 : index
    %81 = vector.load %arg11[%c1_38, %c0_39, %c0_40] : memref<2x8x32xf32, #tpu.memory_space<vmem>>, vector<1x8x32xf32>
    %82 = vector.shape_cast %81 : vector<1x8x32xf32> to vector<8x32xf32>
    %83 = vector.shape_cast %80 : vector<8x32xf32> to vector<1x8x32xf32>
    tpu.vector_store %arg11[%c1_38, %c0_39, %c0_40], %83 {strides = array<i32>} : memref<2x8x32xf32, #tpu.memory_space<vmem>>, vector<1x8x32xf32>,
    %c1_41 = arith.constant 1 : index
    %c0_42 = arith.constant 0 : index
    %c0_43 = arith.constant 0 : index
    %84 = vector.load %arg12[%c1_41, %c0_42, %c0_43] : memref<2x8x32xf32, #tpu.memory_space<vmem>>, vector<1x8x32xf32>
    %85 = vector.shape_cast %84 : vector<1x8x32xf32> to vector<8x32xf32>
    %86 = vector.shape_cast %78 : vector<8x32xf32> to vector<1x8x32xf32>
    tpu.vector_store %arg12[%c1_41, %c0_42, %c0_43], %86 {strides = array<i32>} : memref<2x8x32xf32, #tpu.memory_space<vmem>>, vector<1x8x32xf32>,
    %c1_i32 = arith.constant 1 : i32
    %87 = arith.cmpi sge, %arg0, %c1_i32 : i32
    %88 = arith.extui %87 : i1 to i32
    %c0_i32_44 = arith.constant 0 : i32
    %89 = arith.cmpi ne, %88, %c0_i32_44 : i32
    scf.if %89 {
      %93 = arith.truncf %80 : vector<8x32xf32> to vector<8x32xbf16>
      %c0_46 = arith.constant 0 : index
      %c0_47 = arith.constant 0 : index
      %94 = vector.load %arg8[%c0_46, %c0_47] : memref<32x128xbf16, #tpu.memory_space<vmem>>, vector<32x128xbf16>
      %cst_48 = arith.constant dense<0.000000e+00> : vector<8x128xf32>
      %95 = tpu.matmul %93, %94, %cst_48 {dimension_numbers = #tpu.dot_dimension_numbers<[1], [0], [0], [1], [0, 0, 1, 1], [], []>} : vector<8x32xbf16>, vector<32x128xbf16>, vector<8x128xf32> -> vector<8x128xf32>
      %c0_49 = arith.constant 0 : index
      %c0_50 = arith.constant 0 : index
      %96 = vector.load %arg9[%c0_49, %c0_50] : memref<1x128xf32, #tpu.memory_space<vmem>>, vector<1x128xf32>
      %97 = vector.broadcast %96 : vector<1x128xf32> to vector<8x128xf32>
      %98 = arith.addf %95, %97 : vector<8x128xf32>
      %cst_51 = arith.constant dense<0xFF800000> : vector<8xf32>
      %99 = vector.multi_reduction <maximumf>, %98, %cst_51 [1] : vector<8x128xf32> to vector<8xf32>
      %100 = vector.shape_cast %99 : vector<8xf32> to vector<8x1xf32>
      %101 = vector.broadcast %100 : vector<8x1xf32> to vector<8x128xf32>
      %102 = arith.subf %98, %101 : vector<8x128xf32>
      %103 = math.exp %102 : vector<8x128xf32>
      %cst_52 = arith.constant dense<0.000000e+00> : vector<8xf32>
      %104 = vector.multi_reduction <add>, %103, %cst_52 [1] : vector<8x128xf32> to vector<8xf32>
      %105 = vector.shape_cast %104 : vector<8xf32> to vector<8x1xf32>
      %106 = math.log %105 : vector<8x1xf32>
      %107 = arith.addf %100, %106 : vector<8x1xf32>
      %c0_53 = arith.constant 0 : index
      %c0_54 = arith.constant 0 : index
      %c0_55 = arith.constant 0 : index
      %108 = vector.load %arg7[%c0_53, %c0_54, %c0_55] : memref<1x8x128xf32, #tpu.memory_space<vmem>>, vector<1x8x128xf32>
      %109 = vector.shape_cast %108 : vector<1x8x128xf32> to vector<8x128xf32>
      %110 = arith.mulf %98, %109 : vector<8x128xf32>
      %cst_56 = arith.constant dense<0.000000e+00> : vector<8xf32>
      %111 = vector.multi_reduction <add>, %110, %cst_56 [1] : vector<8x128xf32> to vector<8xf32>
      %112 = vector.shape_cast %111 : vector<8xf32> to vector<8x1xf32>
      %c0_57 = arith.constant 0 : index
      %c0_58 = arith.constant 0 : index
      %113 = vector.load %arg13[%c0_57, %c0_58] : memref<8x1xf32, #tpu.memory_space<vmem>>, vector<8x1xf32>
      %114 = arith.subf %107, %112 : vector<8x1xf32>
      %115 = arith.addf %113, %114 : vector<8x1xf32>
      %c0_59 = arith.constant 0 : index
      %c0_60 = arith.constant 0 : index
      %116 = vector.load %arg13[%c0_59, %c0_60] : memref<8x1xf32, #tpu.memory_space<vmem>>, vector<8x1xf32>
      tpu.vector_store %arg13[%c0_59, %c0_60], %115 {strides = array<i32>} : memref<8x1xf32, #tpu.memory_space<vmem>>, vector<8x1xf32>,
    } else {
    }
    %c6_i32 = arith.constant 6 : i32
    %90 = arith.cmpi eq, %arg0, %c6_i32 : i32
    %91 = arith.extui %90 : i1 to i32
    %c0_i32_45 = arith.constant 0 : i32
    %92 = arith.cmpi ne, %91, %c0_i32_45 : i32
    scf.if %92 {
      %c0_46 = arith.constant 0 : index
      %c0_47 = arith.constant 0 : index
      %93 = vector.load %arg13[%c0_46, %c0_47] : memref<8x1xf32, #tpu.memory_space<vmem>>, vector<8x1xf32>
      %c0_48 = arith.constant 0 : index
      %c0_49 = arith.constant 0 : index
      %94 = vector.load %arg10[%c0_48, %c0_49] : memref<8x1xf32, #tpu.memory_space<vmem>>, vector<8x1xf32>
      tpu.vector_store %arg10[%c0_48, %c0_49], %93 {strides = array<i32>} : memref<8x1xf32, #tpu.memory_space<vmem>>, vector<8x1xf32>,
    } else {
    }
    return
  }
  func.func @transform_0(%arg0: i32) -> (i32, i32, i32) {
    %c0_i32 = arith.constant 0 : i32
    %c0_i32_0 = arith.constant 0 : i32
    %c0_i32_1 = arith.constant 0 : i32
    return %arg0, %c0_i32, %c0_i32_0 : i32, i32, i32
  }
  func.func @transform_1(%arg0: i32) -> (i32, i32, i32) {
    %c0_i32 = arith.constant 0 : i32
    %c0_i32_0 = arith.constant 0 : i32
    %c0_i32_1 = arith.constant 0 : i32
    %c0_i32_2 = arith.constant 0 : i32
    return %c0_i32, %c0_i32_0, %c0_i32_1 : i32, i32, i32
  }
  func.func @transform_2(%arg0: i32) -> (i32, i32, i32) {
    %c0_i32 = arith.constant 0 : i32
    %c0_i32_0 = arith.constant 0 : i32
    %c0_i32_1 = arith.constant 0 : i32
    %c0_i32_2 = arith.constant 0 : i32
    return %c0_i32, %c0_i32_0, %c0_i32_1 : i32, i32, i32
  }
  func.func @transform_3(%arg0: i32) -> (i32, i32, i32) {
    %c0_i32 = arith.constant 0 : i32
    %c0_i32_0 = arith.constant 0 : i32
    %c0_i32_1 = arith.constant 0 : i32
    %c0_i32_2 = arith.constant 0 : i32
    return %c0_i32, %c0_i32_0, %c0_i32_1 : i32, i32, i32
  }
  func.func @transform_4(%arg0: i32) -> (i32, i32, i32) {
    %c0_i32 = arith.constant 0 : i32
    %c0_i32_0 = arith.constant 0 : i32
    %c0_i32_1 = arith.constant 0 : i32
    %c0_i32_2 = arith.constant 0 : i32
    return %c0_i32, %c0_i32_0, %c0_i32_1 : i32, i32, i32
  }
  func.func @transform_5(%arg0: i32) -> (i32, i32, i32) {
    %c0_i32 = arith.constant 0 : i32
    %c0_i32_0 = arith.constant 0 : i32
    %c0_i32_1 = arith.constant 0 : i32
    %c0_i32_2 = arith.constant 0 : i32
    return %c0_i32, %c0_i32_0, %c0_i32_1 : i32, i32, i32
  }
  func.func @transform_6(%arg0: i32) -> (i32, i32, i32) {
    %c0_i32 = arith.constant 0 : i32
    %c0_i32_0 = arith.constant 0 : i32
    %c0_i32_1 = arith.constant 0 : i32
    return %arg0, %c0_i32, %c0_i32_0 : i32, i32, i32
  }
  func.func @transform_7(%arg0: i32) -> (i32, i32) {
    %c0_i32 = arith.constant 0 : i32
    %c0_i32_0 = arith.constant 0 : i32
    %c0_i32_1 = arith.constant 0 : i32
    return %c0_i32, %c0_i32_0 : i32, i32
  }
  func.func @transform_8(%arg0: i32) -> (i32, i32) {
    %c0_i32 = arith.constant 0 : i32
    %c0_i32_0 = arith.constant 0 : i32
    %c0_i32_1 = arith.constant 0 : i32
    return %c0_i32, %c0_i32_0 : i32, i32
  }
  func.func @transform_9(%arg0: i32) -> (i32, i32) {
    %c0_i32 = arith.constant 0 : i32
    %c0_i32_0 = arith.constant 0 : i32
    %c0_i32_1 = arith.constant 0 : i32
    return %c0_i32, %c0_i32_0 : i32, i32
  }
}

</mosaic_0001>

<llo_original>
// kernel: seq2seq_forward.4
$region0: #{seq2seq_forward.4}
  #allocation0 [shape = 'u32[]', space=smem, size = 0x4, offset = 0x4, fixed_abs, tag = 'smem constant byte address 0x4 - core index']
  #allocation1 [shape = 'u32[144,128]{1,0:T(1,128)}', space=vmem, size = 0x12000, scoped, tag = 'internal scratch']
  #allocation2 [shape = 'f32[8,32]{1,0:T(8,128)}', space=vmem, size = 0x1000, scoped, tag = 'scratch operand']
  #allocation3 [shape = 'f32[8,32]{1,0:T(8,128)}', space=vmem, size = 0x1000, scoped, tag = 'scratch operand']
  %s0 = inlined_call_operand.vmem [shape: f32[8,8,128], index: 0, kind: input, shape index: {}]
  %s1 = inlined_call_operand.vmem [shape: bf16[32,128], index: 1, kind: input, shape index: {}]
  %s2 = inlined_call_operand.vmem [shape: s32[8,1], index: 2, kind: input, shape index: {}]
  %s3 = inlined_call_operand.hbm [shape: f32[8,8,32], index: 3, kind: output, shape index: {0}]
  %s4 = inlined_call_operand.vmem [shape: f32[8,32], index: 4, kind: output, shape index: {1}]
  %s5 = inlined_call_operand.vmem [shape: f32[8,32], index: 5, kind: output, shape index: {2}]
  %6 = xla_tuple %s3, %s4, %s5
  %s7 = sld [smem:[#allocation0]]
  $region69: #{seq2seq_forward.4} parent=0
    _
  %s9 = ssub.s32 1, %s7
  %s10 = scalar_select 0, %s9, %s7
  $region1: #{seq2seq_forward.4} parent=0
    #allocation4 [shape = 'u8[8192]{0}', space=vmem, size = 0x2000, scoped, tag = 'output window, operand 0']
    #allocation5 [shape = 's32[2]{0}', space=sflag, size = 0x8, scoped, tag = 'scoped memory for seq2seq_forward.4']
    %11 = vsyncpa [#allocation5], 0
    %s12 = scalar_lea.sflag [#allocation5], 1
    %13 = vsyncpa %s12, 0
    loop: start=0, step=1, limit=10
    $region2: #{seq2seq_forward.4} parent=1 // loop_pre_header
      _
    $region3: #{seq2seq_forward.4} parent=1 // loop_header
      %s15 = sphi 0, %s19
      %p16 = scmp.ge.s32.totalorder %s15, 10
      %s25 = sphi 0, %s27
      %s28 = sphi 0, %s25
      %s29 = sphi 0, %s28
      %s45 = sphi 0, %s29
      %s49 = sphi 0, %s49
      %s51 = sphi 0, %s49
      %s52 = sphi 0, %s51
      %s66 = sphi 0, %s52
      %s70 = sphi 0, %s70
      %s72 = sphi 0, %s70
      %s73 = sphi 0, %s72
      %s87 = sphi 0, %s73
      %s93 = sphi 0, %s95
      %s96 = sphi 0, %s93
      %s97 = sphi 0, %s96
      %s113 = sphi 0, %s97
      %s117 = sphi 0, %s117
      %s119 = sphi 0, %s117
      %s120 = sphi 0, %s119
      %s134 = sphi 0, %s120
      %s138 = sphi 0, %s138
      %s140 = sphi 0, %s138
      %s141 = sphi 0, %s140
      %s155 = sphi 0, %s141
    $region4: #{seq2seq_forward.4} parent=1 // loop_header_branch
      %18 = sbr.rel (%p16) target = $region8
    $region5: #{seq2seq_forward.4} parent=1 // loop_body
      %s20 = ssub.s32 %s15, 1
      %s21 = ssub.s32 %s15, 2
      %s22 = sadd.s32 %s15, 1
      %s23 = ssub.s32 %s15, %s22
      %p24 = scmp.eq.s32.totalorder %s23, 0
      %s26 = sadd.s32 %s25, 1
      %s27 = scalar_select %p24, %s25, %s26
      %p30 = pneg %p24
      %p31 = scmp.eq.s32.totalorder %s15, 7
      %p32 = por %p30, %p31
      %p33 = scmp.ne.s32.totalorder %s25, %s28
      %p34 = scmp.eq.s32.totalorder %s15, 0
      %p35 = por %p33, %p34
      %p36 = scmp.ne.s32.totalorder %s25, %s28
      %p37 = scmp.eq.s32.totalorder %s20, 7
      %p38 = por %p36, %p37
      %p39 = scmp.ne.s32.totalorder %s28, %s29
      %p40 = scmp.eq.s32.totalorder %s20, 0
      %p41 = por %p39, %p40
      %p42 = scmp.ne.s32.totalorder %s28, %s29
      %p43 = scmp.eq.s32.totalorder %s21, 7
      %p44 = por %p42, %p43
      %p46 = scmp.ne.s32.totalorder %s29, %s45
      %p47 = scmp.eq.s32.totalorder %s21, 0
      %p48 = por %p46, %p47
      %s50 = sadd.s32 %s49, 1
      %p53 = scmp.eq.s32.totalorder %s15, 7
      %p54 = scmp.ne.s32.totalorder %s49, %s51
      %p55 = scmp.eq.s32.totalorder %s15, 0
      %p56 = por %p54, %p55
      %p57 = scmp.ne.s32.totalorder %s49, %s51
      %p58 = scmp.eq.s32.totalorder %s20, 7
      %p59 = por %p57, %p58
      %p60 = scmp.ne.s32.totalorder %s51, %s52
      %p61 = scmp.eq.s32.totalorder %s20, 0
      %p62 = por %p60, %p61
      %p63 = scmp.ne.s32.totalorder %s51, %s52
      %p64 = scmp.eq.s32.totalorder %s21, 7
      %p65 = por %p63, %p64
      %p67 = scmp.ne.s32.totalorder %s52, %s66
      %p68 = scmp.eq.s32.totalorder %s21, 0
      %p69 = por %p67, %p68
      %s71 = sadd.s32 %s70, 1
      %p74 = scmp.eq.s32.totalorder %s15, 7
      %p75 = scmp.ne.s32.totalorder %s70, %s72
      %p76 = scmp.eq.s32.totalorder %s15, 0
      %p77 = por %p75, %p76
      %p78 = scmp.ne.s32.totalorder %s70, %s72
      %p79 = scmp.eq.s32.totalorder %s20, 7
      %p80 = por %p78, %p79
      %p81 = scmp.ne.s32.totalorder %s72, %s73
      %p82 = scmp.eq.s32.totalorder %s20, 0
      %p83 = por %p81, %p82
      %p84 = scmp.ne.s32.totalorder %s72, %s73
      %p85 = scmp.eq.s32.totalorder %s21, 7
      %p86 = por %p84, %p85
      %p88 = scmp.ne.s32.totalorder %s73, %s87
      %p89 = scmp.eq.s32.totalorder %s21, 0
      %p90 = por %p88, %p89
      %s91 = ssub.s32 %s15, %s22
      %p92 = scmp.eq.s32.totalorder %s91, 0
      %s94 = sadd.s32 %s93, 1
      %s95 = scalar_select %p92, %s93, %s94
      %p98 = pneg %p92
      %p99 = scmp.eq.s32.totalorder %s15, 7
      %p100 = por %p98, %p99
      %p101 = scmp.ne.s32.totalorder %s93, %s96
      %p102 = scmp.eq.s32.totalorder %s15, 0
      %p103 = por %p101, %p102
      %p104 = scmp.ne.s32.totalorder %s93, %s96
      %p105 = scmp.eq.s32.totalorder %s20, 7
      %p106 = por %p104, %p105
      %p107 = scmp.ne.s32.totalorder %s96, %s97
      %p108 = scmp.eq.s32.totalorder %s20, 0
      %p109 = por %p107, %p108
      %p110 = scmp.ne.s32.totalorder %s96, %s97
      %p111 = scmp.eq.s32.totalorder %s21, 7
      %p112 = por %p110, %p111
      %p114 = scmp.ne.s32.totalorder %s97, %s113
      %p115 = scmp.eq.s32.totalorder %s21, 0
      %p116 = por %p114, %p115
      %s118 = sadd.s32 %s117, 1
      %p121 = scmp.eq.s32.totalorder %s15, 7
      %p122 = scmp.ne.s32.totalorder %s117, %s119
      %p123 = scmp.eq.s32.totalorder %s15, 0
      %p124 = por %p122, %p123
      %p125 = scmp.ne.s32.totalorder %s117, %s119
      %p126 = scmp.eq.s32.totalorder %s20, 7
      %p127 = por %p125, %p126
      %p128 = scmp.ne.s32.totalorder %s119, %s120
      %p129 = scmp.eq.s32.totalorder %s20, 0
      %p130 = por %p128, %p129
      %p131 = scmp.ne.s32.totalorder %s119, %s120
      %p132 = scmp.eq.s32.totalorder %s21, 7
      %p133 = por %p131, %p132
      %p135 = scmp.ne.s32.totalorder %s120, %s134
      %p136 = scmp.eq.s32.totalorder %s21, 0
      %p137 = por %p135, %p136
      %s139 = sadd.s32 %s138, 1
      %p142 = scmp.eq.s32.totalorder %s15, 7
      %p143 = scmp.ne.s32.totalorder %s138, %s140
      %p144 = scmp.eq.s32.totalorder %s15, 0
      %p145 = por %p143, %p144
      %p146 = scmp.ne.s32.totalorder %s138, %s140
      %p147 = scmp.eq.s32.totalorder %s20, 7
      %p148 = por %p146, %p147
      %p149 = scmp.ne.s32.totalorder %s140, %s141
      %p150 = scmp.eq.s32.totalorder %s20, 0
      %p151 = por %p149, %p150
      %p152 = scmp.ne.s32.totalorder %s140, %s141
      %p153 = scmp.eq.s32.totalorder %s21, 7
      %p154 = por %p152, %p153
      %p156 = scmp.ne.s32.totalorder %s141, %s155
      %p157 = scmp.eq.s32.totalorder %s21, 0
      %p158 = por %p156, %p157
      %p159 = scmp.le.s32.totalorder 1, %s15
      %p160 = scmp.lt.s32.totalorder %s15, 9
      %p161 = pnand %p159, %p160
      %p162 = pneg %p161
      // Predicated region
      $region9: #{seq2seq_forward.4} parent=5 // pred_check
        _
      $region10: #{seq2seq_forward.4} parent=5 // pred_check_branch
        %164 = sbr.rel (%p161) target = $region12
      $region11: #{seq2seq_forward.4} parent=5 // pred_region
        %s165 = ssub.s32 %s15, 1
        // Predicated region
        $region13: #{seq2seq_forward.4} parent=11 // pred_check
          %p166 = pneg %p62
        $region14: #{seq2seq_forward.4} parent=11 // pred_check_branch
          %168 = sbr.rel (%p166) target = $region16
        $region15: #{seq2seq_forward.4} parent=11 // pred_region
          _
        $region16: #{seq2seq_forward.4} parent=11 // pred_fallthru
          _
        // Predicated region
        $region17: #{seq2seq_forward.4} parent=11 // pred_check
          %p169 = pneg %p83
        $region18: #{seq2seq_forward.4} parent=11 // pred_check_branch
          %171 = sbr.rel (%p169) target = $region20
        $region19: #{seq2seq_forward.4} parent=11 // pred_region
          _
        $region20: #{seq2seq_forward.4} parent=11 // pred_fallthru
          _
      $region12: #{seq2seq_forward.4} parent=5 // pred_fallthru
        _
      %p172 = scmp.lt.s32.totalorder %s15, 8
      // Predicated region
      $region21: #{seq2seq_forward.4} parent=5 // pred_check
        %p173 = pneg %p172
      $region22: #{seq2seq_forward.4} parent=5 // pred_check_branch
        %175 = sbr.rel (%p173) target = $region24
      $region23: #{seq2seq_forward.4} parent=5 // pred_region
        // Predicated region
        $region25: #{seq2seq_forward.4} parent=23 // pred_check
          %p176 = pneg %p35
        $region26: #{seq2seq_forward.4} parent=23 // pred_check_branch
          %178 = sbr.rel (%p176) target = $region28
        $region27: #{seq2seq_forward.4} parent=23 // pred_region
          %p179 = scmp.lt.s32.totalorder %s15, 7
          %s180 = scalar_select %p179, %s15, 7
          %s181 = smul.addr %s180, 8
          %s182 = scalar_lea.vmem %s0, %s181
        $region28: #{seq2seq_forward.4} parent=23 // pred_fallthru
          _
      $region24: #{seq2seq_forward.4} parent=5 // pred_fallthru
        _
      %p183 = scmp.le.s32.totalorder 1, %s15
      %p184 = scmp.lt.s32.totalorder %s15, 9
      %p185 = pnand %p183, %p184
      %p186 = pneg %p185
      // Predicated region
      $region29: #{seq2seq_forward.4} parent=5 // pred_check
        _
      $region30: #{seq2seq_forward.4} parent=5 // pred_check_branch
        %188 = sbr.rel (%p185) target = $region32
      $region31: #{seq2seq_forward.4} parent=5 // pred_region
        %s189 = ssub.s32 %s15, 1
        %p190 = scmp.lt.s32.totalorder %s20, 7
        %s191 = scalar_select %p190, %s20, 7
        %s192 = smul.addr %s191, 8
        %s193 = scalar_lea.vmem %s0, %s192
        %p194 = pneg %p41
        %p195 = pneg %p38
        %p196 = pneg %p62
        %p197 = pneg %p59
        %p198 = pneg %p83
        %p199 = pneg %p80
        %p200 = pneg %p109
        %p201 = pneg %p106
        %s202 = sand.u32 %s96, 1
        %s203 = scalar_lea.sflag [#allocation5], %s202
        %s204 = sand.u32 %s96, 1
        %s205 = smul.addr %s204, 8
        %s206 = scalar_lea.vmem [#allocation4], %s205
        %p207 = pneg %p130
        %p208 = pneg %p127
        %p209 = pneg %p151
        %p210 = pneg %p148
        %p211 = scmp.lt.s32.totalorder %s20, 7
        %s212 = scalar_select %p211, %s20, 7
        %s213 = smul.addr %s212, 8
        %s214 = scalar_lea.vmem %s0, %s213
        %p216 = scmp.eq.s32.totalorder %s20, 0
        // Predicated region
        $region33: #{seq2seq_forward.4} parent=31 // pred_check
          %p217 = pneg %p216
        $region34: #{seq2seq_forward.4} parent=31 // pred_check_branch
          %219 = sbr.rel (%p217) target = $region36
        $region35: #{seq2seq_forward.4} parent=31 // pred_region
          %vm220 = vcmask 261120
          %221 = vst.msk [vmem:[#allocation2] sm:$0xff] %vm220, 0.0
          %222 = vst.msk [vmem:[#allocation3] sm:$0xff] %vm220, 0.0
        $region36: #{seq2seq_forward.4} parent=31 // pred_fallthru
          _
        %v223 = vld [vmem:[#allocation2] sm:$0xff]
        %v224 = vld [vmem:[#allocation3] sm:$0xff]
        %v225 = vld [vmem:[%s214] sm:$0xff]
        %v226 = vpack.c.bf16 %v223, %v223
        %v227 = vld [vmem:[%s1] sm:$0xf]
        %v228 = vld [vmem:[%s1 + $0x4] sm:$0xf]
        %v229 = vld [vmem:[%s1 + $0x8] sm:$0xf]
        %v230 = vld [vmem:[%s1 + $0xc] sm:$0xf]
        %v235 = vunpack.c.l.b16 %v227
        %v236 = vunpack.c.l.b16 %v228
        %v237 = vunpack.c.l.b16 %v229
        %v238 = vunpack.c.l.b16 %v230
        %v239 = vpack.c.b16 %v236, %v235
        %v240 = vpack.c.b16 %v238, %v237
        %vm243 = vcmask 261120
        %v245 = vsel %vm243, %v226, 0
        %247 = vmatprep.subr.bf16.mxu0 0
        %248 = vmatpush1.bf16.msra.mxu0 %v239
        %249 = vmatprep.subr.bf16.mxu0 0
        %250 = vmatpush1.bf16.msra.mxu0 %v240
        %251 = vmatprep.subr.bf16.mxu0 0
        %252 = vmatpush1.bf16.msra.mxu0 0
        %253 = vmatprep.subr.bf16.mxu0 0
        %254 = vmatpush1.bf16.msra.mxu0 0
        %255 = vmatprep.subr.bf16.mxu0 0
        %256 = vmatpush1.bf16.msra.mxu0 0
        %257 = vmatprep.subr.bf16.mxu0 0
        %258 = vmatpush1.bf16.msra.mxu0 0
        %259 = vmatprep.subr.bf16.mxu0 0
        %260 = vmatpush1.bf16.msra.mxu0 0
        %261 = vmatprep.subr.bf16.mxu0 0
        %262 = vmatpush1.bf16.msra.mxu0 0
        %263 = vmatprep.subr.bf16.mxu0 0
        %264 = vmatpush1.bf16.msra.mxu0 0
        %265 = vmatprep.subr.bf16.mxu0 0
        %266 = vmatpush1.bf16.msra.mxu0 0
        %267 = vmatprep.subr.bf16.mxu0 0
        %268 = vmatpush1.bf16.msra.mxu0 0
        %269 = vmatprep.subr.bf16.mxu0 0
        %270 = vmatpush1.bf16.msra.mxu0 0
        %271 = vmatprep.subr.bf16.mxu0 0
        %272 = vmatpush1.bf16.msra.mxu0 0
        %273 = vmatprep.subr.bf16.mxu0 0
        %274 = vmatpush1.bf16.msra.mxu0 0
        %275 = vmatprep.subr.bf16.mxu0 0
        %276 = vmatpush1.bf16.msra.mxu0 0
        %277 = vmatprep.subr.bf16.mxu0 0
        %278 = vmatpush1.bf16.msra.mxu0 0
        %279 = vmatprep.mubr.bf16.mxu0 0
        %280 = vmatmul.mubr.bf16.gmra.mrb[0].mxu0 %v245
        %v281 = vpop.f32.mrb[0].mxu0
        %v282 = vadd.f32 0.0, %v281
        %v283 = vpop.f32.mrb[0].mxu0
        %v284 = vpop.f32.mrb[0].mxu0
        %v285 = vpop.f32.mrb[0].mxu0
        %286 = vdwg.mxu0
        %v287 = vadd.f32 %v225, %v282
        %v288 = vlaneseq
        %v289 = vand.u32 %v288, 127
        %vm290 = vcmp.ge.s32.totalorder %v289, 64
        %vm291 = vcmp.lt.s32.totalorder %v289, 96
        %vm292 = vmand %vm290, %vm291
        %v293 = vtanh.pop %v287
        %v294 = vxor.u32 %v287, 2147483648
        %v295 = vmul.f32 %v294, 1.442695
        %v296 = vpow.pop %v295
        %v297 = vadd.f32 %v296, 1.0
        %v298 = vrcp.pop %v297
        %v299 = vmul.f32 1.0, %v298
        %v300 = vsel %vm292, %v293, %v299
        %302 = vrot.lane.b32.xlu0 %v224, 32
        %v303 = vpop.permute.xlu0 %302
        %v305 = vmul.f32 %v300, %v303
        %307 = vrot.lane.b32.xlu0 %v300, 64
        %v308 = vpop.permute.xlu0 %307
        %v310 = vmul.f32 %v300, %v308
        %312 = vrot.lane.b32.xlu0 %v310, 32
        %v313 = vpop.permute.xlu0 %312
        %v315 = vadd.f32 %v305, %v313
        %v316 = vtanh.pop %v315
        %318 = vrot.lane.b32.xlu0 %v316, 64
        %v319 = vpop.permute.xlu0 %318
        %v321 = vmul.f32 %v300, %v319
        %v322 = vld [vmem:[%s2] sm:$0xff]
        %v323 = vstv %s20
        %vm324 = vcmp.lt.s32.totalorder %v323, %v322
        %v325 = vsel %vm324, 1, 0
        %326 = vset.pattern.permute.xlu0 0
        %327 = vperm.xlu0 %326, %v325
        %v328 = vpop.permute.xlu0 %327
        %vm329 = vcmp.eq.s32.totalorder %v328, 1
        %331 = vrot.lane.b32.xlu0 %v223, 96
        %v332 = vpop.permute.xlu0 %331
        %v334 = vsel %vm329, %v321, %v332
        %v335 = vsel %vm329, %v315, %v303
        %337 = vrot.lane.b32.xlu0 %v334, 32
        %v338 = vpop.permute.xlu0 %337
        %340 = vst.msk [vmem:[#allocation2] sm:$0xff] %vm243, %v338
        %342 = vrot.lane.b32.xlu0 %v335, 96
        %v343 = vpop.permute.xlu0 %342
        %345 = vst.msk [vmem:[#allocation3] sm:$0xff] %vm243, %v343
        %346 = vst.msk [vmem:[%s206] sm:$0xff] %vm243, %v338
        %p347 = scmp.eq.s32.totalorder %s20, 7
        // Predicated region
        $region37: #{seq2seq_forward.4} parent=31 // pred_check
          %p348 = pneg %p347
        $region38: #{seq2seq_forward.4} parent=31 // pred_check_branch
          %350 = sbr.rel (%p348) target = $region40
        $region39: #{seq2seq_forward.4} parent=31 // pred_region
          %351 = vst.msk [vmem:[%s4] sm:$0xff] %vm243, %v338
          %352 = vst.msk [vmem:[%s5] sm:$0xff] %vm243, %v343
        $region40: #{seq2seq_forward.4} parent=31 // pred_fallthru
          _
        %s353 = sand.u32 %s96, 1
        %s354 = scalar_lea.sflag [#allocation5], %s353
        %s355 = sand.u32 %s96, 1
        %s356 = smul.addr %s355, 8
        %s357 = scalar_lea.vmem [#allocation4], %s356
        // Predicated region
        $region41: #{seq2seq_forward.4} parent=31 // pred_check
          %p358 = pneg %p106
        $region42: #{seq2seq_forward.4} parent=31 // pred_check_branch
          %360 = sbr.rel (%p358) target = $region44
        $region43: #{seq2seq_forward.4} parent=31 // pred_region
          %s362 = ssub.s32 128, 128
          %363 = vsyncadd %s354, %s362
          %s364 = smul.addr %s20, 128
          %s365 = scalar_lea.hbm %s3, %s364
          %s367 = sshll.u32 %s357, 4
          %s368 = int_to_ptr.vmem [resolvable:$true] %s367
          %370 = dma.vmem_to_hbm [thread:$0]  %s368, 128, %s365, %s354
        $region44: #{seq2seq_forward.4} parent=31 // pred_fallthru
          _
        // Predicated region
        $region45: #{seq2seq_forward.4} parent=31 // pred_check
          %p371 = pneg %p127
        $region46: #{seq2seq_forward.4} parent=31 // pred_check_branch
          %373 = sbr.rel (%p371) target = $region48
        $region47: #{seq2seq_forward.4} parent=31 // pred_region
          _
        $region48: #{seq2seq_forward.4} parent=31 // pred_fallthru
          _
        // Predicated region
        $region49: #{seq2seq_forward.4} parent=31 // pred_check
          %p374 = pneg %p148
        $region50: #{seq2seq_forward.4} parent=31 // pred_check_branch
          %376 = sbr.rel (%p374) target = $region52
        $region51: #{seq2seq_forward.4} parent=31 // pred_region
          _
        $region52: #{seq2seq_forward.4} parent=31 // pred_fallthru
          _
        // Predicated region
        $region53: #{seq2seq_forward.4} parent=31 // pred_check
          %p377 = pneg %p127
        $region54: #{seq2seq_forward.4} parent=31 // pred_check_branch
          %379 = sbr.rel (%p377) target = $region56
        $region55: #{seq2seq_forward.4} parent=31 // pred_region
          _
        $region56: #{seq2seq_forward.4} parent=31 // pred_fallthru
          _
        // Predicated region
        $region57: #{seq2seq_forward.4} parent=31 // pred_check
          %p380 = pneg %p148
        $region58: #{seq2seq_forward.4} parent=31 // pred_check_branch
          %382 = sbr.rel (%p380) target = $region60
        $region59: #{seq2seq_forward.4} parent=31 // pred_region
          _
        $region60: #{seq2seq_forward.4} parent=31 // pred_fallthru
          _
      $region32: #{seq2seq_forward.4} parent=5 // pred_fallthru
        _
      %p383 = scmp.le.s32.totalorder 2, %s15
      // Predicated region
      $region61: #{seq2seq_forward.4} parent=5 // pred_check
        %p384 = pneg %p383
      $region62: #{seq2seq_forward.4} parent=5 // pred_check_branch
        %386 = sbr.rel (%p384) target = $region64
      $region63: #{seq2seq_forward.4} parent=5 // pred_region
        %s387 = ssub.s32 %s15, 2
        // Predicated region
        $region65: #{seq2seq_forward.4} parent=63 // pred_check
          %p388 = pneg %p112
        $region66: #{seq2seq_forward.4} parent=63 // pred_check_branch
          %390 = sbr.rel (%p388) target = $region68
        $region67: #{seq2seq_forward.4} parent=63 // pred_region
          %s391 = sand.u32 %s97, 1
          %s392 = scalar_lea.sflag [#allocation5], %s391
          %s393 = sand.u32 %s97, 1
          %s394 = smul.addr %s393, 8
          %s395 = scalar_lea.vmem [#allocation4], %s394
          %396 = dma.done %s392, 128
        $region68: #{seq2seq_forward.4} parent=63 // pred_fallthru
          _
      $region64: #{seq2seq_forward.4} parent=5 // pred_fallthru
        _
    $region6: #{seq2seq_forward.4} parent=1 // loop_footer
      %s19 = sadd.s32 1, %s15
    $region7: #{seq2seq_forward.4} parent=1 // loop_footer_branch
      %14 = sbr.rel target = $region3
    $region8: #{seq2seq_forward.4} parent=1 // loop_exit
      _
    %397 = vsyncpa [#allocation5], 1
    %s398 = scalar_lea.sflag [#allocation5], 1
    %399 = vsyncpa %s398, 1

// kernel: seq2seq_forward.3
$region0: #{seq2seq_forward.3}
  #allocation0 [shape = 'u32[]', space=smem, size = 0x4, offset = 0x4, fixed_abs, tag = 'smem constant byte address 0x4 - core index']
  #allocation1 [shape = 'u32[144,128]{1,0:T(1,128)}', space=vmem, size = 0x12000, scoped, tag = 'internal scratch']
  #allocation2 [shape = 'f32[8,32]{1,0:T(8,128)}', space=vmem, size = 0x1000, scoped, tag = 'scratch operand']
  #allocation3 [shape = 'f32[8,32]{1,0:T(8,128)}', space=vmem, size = 0x1000, scoped, tag = 'scratch operand']
  %s0 = inlined_call_operand.vmem [shape: f32[8,8,128], index: 0, kind: input, shape index: {}]
  %s1 = inlined_call_operand.vmem [shape: bf16[32,128], index: 1, kind: input, shape index: {}]
  %s2 = inlined_call_operand.vmem [shape: s32[8,1], index: 2, kind: input, shape index: {}]
  %s3 = inlined_call_operand.vmem [shape: f32[8,8,32], index: 3, kind: output, shape index: {0}]
  %s4 = inlined_call_operand.vmem [shape: f32[8,32], index: 4, kind: output, shape index: {1}]
  %s5 = inlined_call_operand.vmem [shape: f32[8,32], index: 5, kind: output, shape index: {2}]
  %6 = xla_tuple %s3, %s4, %s5
  %s7 = sld [smem:[#allocation0]]
  $region69: #{seq2seq_forward.3} parent=0
    _
  %s9 = ssub.s32 1, %s7
  %s10 = scalar_select 0, %s9, %s7
  loop: start=0, step=1, limit=10
  $region2: #{seq2seq_forward.3} parent=0 // loop_pre_header
    _
  $region3: #{seq2seq_forward.3} parent=0 // loop_header
    %s12 = sphi 0, %s16
    %p13 = scmp.ge.s32.totalorder %s12, 10
    %s22 = sphi 0, %s24
    %s25 = sphi 0, %s22
    %s26 = sphi 0, %s25
    %s42 = sphi 0, %s26
    %s46 = sphi 0, %s46
    %s48 = sphi 0, %s46
    %s49 = sphi 0, %s48
    %s63 = sphi 0, %s49
    %s67 = sphi 0, %s67
    %s69 = sphi 0, %s67
    %s70 = sphi 0, %s69
    %s84 = sphi 0, %s70
    %s90 = sphi 0, %s92
    %s93 = sphi 0, %s90
    %s94 = sphi 0, %s93
    %s110 = sphi 0, %s94
    %s114 = sphi 0, %s114
    %s116 = sphi 0, %s114
    %s117 = sphi 0, %s116
    %s131 = sphi 0, %s117
    %s135 = sphi 0, %s135
    %s137 = sphi 0, %s135
    %s138 = sphi 0, %s137
    %s152 = sphi 0, %s138
  $region4: #{seq2seq_forward.3} parent=0 // loop_header_branch
    %15 = sbr.rel (%p13) target = $region8
  $region5: #{seq2seq_forward.3} parent=0 // loop_body
    %s17 = ssub.s32 %s12, 1
    %s18 = ssub.s32 %s12, 2
    %s19 = sadd.s32 %s12, 1
    %s20 = ssub.s32 %s12, %s19
    %p21 = scmp.eq.s32.totalorder %s20, 0
    %s23 = sadd.s32 %s22, 1
    %s24 = scalar_select %p21, %s22, %s23
    %p27 = pneg %p21
    %p28 = scmp.eq.s32.totalorder %s12, 7
    %p29 = por %p27, %p28
    %p30 = scmp.ne.s32.totalorder %s22, %s25
    %p31 = scmp.eq.s32.totalorder %s12, 0
    %p32 = por %p30, %p31
    %p33 = scmp.ne.s32.totalorder %s22, %s25
    %p34 = scmp.eq.s32.totalorder %s17, 7
    %p35 = por %p33, %p34
    %p36 = scmp.ne.s32.totalorder %s25, %s26
    %p37 = scmp.eq.s32.totalorder %s17, 0
    %p38 = por %p36, %p37
    %p39 = scmp.ne.s32.totalorder %s25, %s26
    %p40 = scmp.eq.s32.totalorder %s18, 7
    %p41 = por %p39, %p40
    %p43 = scmp.ne.s32.totalorder %s26, %s42
    %p44 = scmp.eq.s32.totalorder %s18, 0
    %p45 = por %p43, %p44
    %s47 = sadd.s32 %s46, 1
    %p50 = scmp.eq.s32.totalorder %s12, 7
    %p51 = scmp.ne.s32.totalorder %s46, %s48
    %p52 = scmp.eq.s32.totalorder %s12, 0
    %p53 = por %p51, %p52
    %p54 = scmp.ne.s32.totalorder %s46, %s48
    %p55 = scmp.eq.s32.totalorder %s17, 7
    %p56 = por %p54, %p55
    %p57 = scmp.ne.s32.totalorder %s48, %s49
    %p58 = scmp.eq.s32.totalorder %s17, 0
    %p59 = por %p57, %p58
    %p60 = scmp.ne.s32.totalorder %s48, %s49
    %p61 = scmp.eq.s32.totalorder %s18, 7
    %p62 = por %p60, %p61
    %p64 = scmp.ne.s32.totalorder %s49, %s63
    %p65 = scmp.eq.s32.totalorder %s18, 0
    %p66 = por %p64, %p65
    %s68 = sadd.s32 %s67, 1
    %p71 = scmp.eq.s32.totalorder %s12, 7
    %p72 = scmp.ne.s32.totalorder %s67, %s69
    %p73 = scmp.eq.s32.totalorder %s12, 0
    %p74 = por %p72, %p73
    %p75 = scmp.ne.s32.totalorder %s67, %s69
    %p76 = scmp.eq.s32.totalorder %s17, 7
    %p77 = por %p75, %p76
    %p78 = scmp.ne.s32.totalorder %s69, %s70
    %p79 = scmp.eq.s32.totalorder %s17, 0
    %p80 = por %p78, %p79
    %p81 = scmp.ne.s32.totalorder %s69, %s70
    %p82 = scmp.eq.s32.totalorder %s18, 7
    %p83 = por %p81, %p82
    %p85 = scmp.ne.s32.totalorder %s70, %s84
    %p86 = scmp.eq.s32.totalorder %s18, 0
    %p87 = por %p85, %p86
    %s88 = ssub.s32 %s12, %s19
    %p89 = scmp.eq.s32.totalorder %s88, 0
    %s91 = sadd.s32 %s90, 1
    %s92 = scalar_select %p89, %s90, %s91
    %p95 = pneg %p89
    %p96 = scmp.eq.s32.totalorder %s12, 7
    %p97 = por %p95, %p96
    %p98 = scmp.ne.s32.totalorder %s90, %s93
    %p99 = scmp.eq.s32.totalorder %s12, 0
    %p100 = por %p98, %p99
    %p101 = scmp.ne.s32.totalorder %s90, %s93
    %p102 = scmp.eq.s32.totalorder %s17, 7
    %p103 = por %p101, %p102
    %p104 = scmp.ne.s32.totalorder %s93, %s94
    %p105 = scmp.eq.s32.totalorder %s17, 0
    %p106 = por %p104, %p105
    %p107 = scmp.ne.s32.totalorder %s93, %s94
    %p108 = scmp.eq.s32.totalorder %s18, 7
    %p109 = por %p107, %p108
    %p111 = scmp.ne.s32.totalorder %s94, %s110
    %p112 = scmp.eq.s32.totalorder %s18, 0
    %p113 = por %p111, %p112
    %s115 = sadd.s32 %s114, 1
    %p118 = scmp.eq.s32.totalorder %s12, 7
    %p119 = scmp.ne.s32.totalorder %s114, %s116
    %p120 = scmp.eq.s32.totalorder %s12, 0
    %p121 = por %p119, %p120
    %p122 = scmp.ne.s32.totalorder %s114, %s116
    %p123 = scmp.eq.s32.totalorder %s17, 7
    %p124 = por %p122, %p123
    %p125 = scmp.ne.s32.totalorder %s116, %s117
    %p126 = scmp.eq.s32.totalorder %s17, 0
    %p127 = por %p125, %p126
    %p128 = scmp.ne.s32.totalorder %s116, %s117
    %p129 = scmp.eq.s32.totalorder %s18, 7
    %p130 = por %p128, %p129
    %p132 = scmp.ne.s32.totalorder %s117, %s131
    %p133 = scmp.eq.s32.totalorder %s18, 0
    %p134 = por %p132, %p133
    %s136 = sadd.s32 %s135, 1
    %p139 = scmp.eq.s32.totalorder %s12, 7
    %p140 = scmp.ne.s32.totalorder %s135, %s137
    %p141 = scmp.eq.s32.totalorder %s12, 0
    %p142 = por %p140, %p141
    %p143 = scmp.ne.s32.totalorder %s135, %s137
    %p144 = scmp.eq.s32.totalorder %s17, 7
    %p145 = por %p143, %p144
    %p146 = scmp.ne.s32.totalorder %s137, %s138
    %p147 = scmp.eq.s32.totalorder %s17, 0
    %p148 = por %p146, %p147
    %p149 = scmp.ne.s32.totalorder %s137, %s138
    %p150 = scmp.eq.s32.totalorder %s18, 7
    %p151 = por %p149, %p150
    %p153 = scmp.ne.s32.totalorder %s138, %s152
    %p154 = scmp.eq.s32.totalorder %s18, 0
    %p155 = por %p153, %p154
    %p156 = scmp.le.s32.totalorder 1, %s12
    %p157 = scmp.lt.s32.totalorder %s12, 9
    %p158 = pnand %p156, %p157
    %p159 = pneg %p158
    // Predicated region
    $region9: #{seq2seq_forward.3} parent=5 // pred_check
      _
    $region10: #{seq2seq_forward.3} parent=5 // pred_check_branch
      %161 = sbr.rel (%p158) target = $region12
    $region11: #{seq2seq_forward.3} parent=5 // pred_region
      %s162 = ssub.s32 %s12, 1
      // Predicated region
      $region13: #{seq2seq_forward.3} parent=11 // pred_check
        %p163 = pneg %p59
      $region14: #{seq2seq_forward.3} parent=11 // pred_check_branch
        %165 = sbr.rel (%p163) target = $region16
      $region15: #{seq2seq_forward.3} parent=11 // pred_region
        _
      $region16: #{seq2seq_forward.3} parent=11 // pred_fallthru
        _
      // Predicated region
      $region17: #{seq2seq_forward.3} parent=11 // pred_check
        %p166 = pneg %p80
      $region18: #{seq2seq_forward.3} parent=11 // pred_check_branch
        %168 = sbr.rel (%p166) target = $region20
      $region19: #{seq2seq_forward.3} parent=11 // pred_region
        _
      $region20: #{seq2seq_forward.3} parent=11 // pred_fallthru
        _
    $region12: #{seq2seq_forward.3} parent=5 // pred_fallthru
      _
    %p169 = scmp.lt.s32.totalorder %s12, 8
    // Predicated region
    $region21: #{seq2seq_forward.3} parent=5 // pred_check
      %p170 = pneg %p169
    $region22: #{seq2seq_forward.3} parent=5 // pred_check_branch
      %172 = sbr.rel (%p170) target = $region24
    $region23: #{seq2seq_forward.3} parent=5 // pred_region
      // Predicated region
      $region25: #{seq2seq_forward.3} parent=23 // pred_check
        %p173 = pneg %p32
      $region26: #{seq2seq_forward.3} parent=23 // pred_check_branch
        %175 = sbr.rel (%p173) target = $region28
      $region27: #{seq2seq_forward.3} parent=23 // pred_region
        %p176 = scmp.lt.s32.totalorder %s12, 7
        %s177 = scalar_select %p176, %s12, 7
        %s178 = smul.addr %s177, 8
        %s179 = scalar_lea.vmem %s0, %s178
      $region28: #{seq2seq_forward.3} parent=23 // pred_fallthru
        _
    $region24: #{seq2seq_forward.3} parent=5 // pred_fallthru
      _
    %p180 = scmp.le.s32.totalorder 1, %s12
    %p181 = scmp.lt.s32.totalorder %s12, 9
    %p182 = pnand %p180, %p181
    %p183 = pneg %p182
    // Predicated region
    $region29: #{seq2seq_forward.3} parent=5 // pred_check
      _
    $region30: #{seq2seq_forward.3} parent=5 // pred_check_branch
      %185 = sbr.rel (%p182) target = $region32
    $region31: #{seq2seq_forward.3} parent=5 // pred_region
      %s186 = ssub.s32 %s12, 1
      %p187 = scmp.lt.s32.totalorder %s17, 7
      %s188 = scalar_select %p187, %s17, 7
      %s189 = smul.addr %s188, 8
      %s190 = scalar_lea.vmem %s0, %s189
      %p191 = pneg %p38
      %p192 = pneg %p35
      %p193 = pneg %p59
      %p194 = pneg %p56
      %p195 = pneg %p80
      %p196 = pneg %p77
      %p197 = pneg %p106
      %p198 = pneg %p103
      %p199 = scmp.lt.s32.totalorder %s17, 7
      %s200 = scalar_select %p199, %s17, 7
      %s201 = smul.addr %s200, 8
      %s202 = scalar_lea.vmem %s3, %s201
      %p203 = pneg %p127
      %p204 = pneg %p124
      %p205 = pneg %p148
      %p206 = pneg %p145
      %p207 = scmp.lt.s32.totalorder %s17, 7
      %s208 = scalar_select %p207, %s17, 7
      %s209 = smul.addr %s208, 8
      %s210 = scalar_lea.vmem %s0, %s209
      %p211 = scmp.lt.s32.totalorder %s17, 7
      %s212 = scalar_select %p211, %s17, 7
      %s213 = smul.addr %s212, 8
      %s214 = scalar_lea.vmem %s3, %s213
      %p216 = scmp.eq.s32.totalorder %s17, 0
      // Predicated region
      $region33: #{seq2seq_forward.3} parent=31 // pred_check
        %p217 = pneg %p216
      $region34: #{seq2seq_forward.3} parent=31 // pred_check_branch
        %219 = sbr.rel (%p217) target = $region36
      $region35: #{seq2seq_forward.3} parent=31 // pred_region
        %vm220 = vcmask 261120
        %221 = vst.msk [vmem:[#allocation2] sm:$0xff] %vm220, 0.0
        %222 = vst.msk [vmem:[#allocation3] sm:$0xff] %vm220, 0.0
      $region36: #{seq2seq_forward.3} parent=31 // pred_fallthru
        _
      %v223 = vld [vmem:[#allocation2] sm:$0xff]
      %v224 = vld [vmem:[#allocation3] sm:$0xff]
      %v225 = vld [vmem:[%s210] sm:$0xff]
      %v226 = vpack.c.bf16 %v223, %v223
      %v227 = vld [vmem:[%s1] sm:$0xf]
      %v228 = vld [vmem:[%s1 + $0x4] sm:$0xf]
      %v229 = vld [vmem:[%s1 + $0x8] sm:$0xf]
      %v230 = vld [vmem:[%s1 + $0xc] sm:$0xf]
      %v235 = vunpack.c.l.b16 %v227
      %v236 = vunpack.c.l.b16 %v228
      %v237 = vunpack.c.l.b16 %v229
      %v238 = vunpack.c.l.b16 %v230
      %v239 = vpack.c.b16 %v236, %v235
      %v240 = vpack.c.b16 %v238, %v237
      %vm243 = vcmask 261120
      %v245 = vsel %vm243, %v226, 0
      %247 = vmatprep.subr.bf16.mxu0 0
      %248 = vmatpush1.bf16.msra.mxu0 %v239
      %249 = vmatprep.subr.bf16.mxu0 0
      %250 = vmatpush1.bf16.msra.mxu0 %v240
      %251 = vmatprep.subr.bf16.mxu0 0
      %252 = vmatpush1.bf16.msra.mxu0 0
      %253 = vmatprep.subr.bf16.mxu0 0
      %254 = vmatpush1.bf16.msra.mxu0 0
      %255 = vmatprep.subr.bf16.mxu0 0
      %256 = vmatpush1.bf16.msra.mxu0 0
      %257 = vmatprep.subr.bf16.mxu0 0
      %258 = vmatpush1.bf16.msra.mxu0 0
      %259 = vmatprep.subr.bf16.mxu0 0
      %260 = vmatpush1.bf16.msra.mxu0 0
      %261 = vmatprep.subr.bf16.mxu0 0
      %262 = vmatpush1.bf16.msra.mxu0 0
      %263 = vmatprep.subr.bf16.mxu0 0
      %264 = vmatpush1.bf16.msra.mxu0 0
      %265 = vmatprep.subr.bf16.mxu0 0
      %266 = vmatpush1.bf16.msra.mxu0 0
      %267 = vmatprep.subr.bf16.mxu0 0
      %268 = vmatpush1.bf16.msra.mxu0 0
      %269 = vmatprep.subr.bf16.mxu0 0
      %270 = vmatpush1.bf16.msra.mxu0 0
      %271 = vmatprep.subr.bf16.mxu0 0
      %272 = vmatpush1.bf16.msra.mxu0 0
      %273 = vmatprep.subr.bf16.mxu0 0
      %274 = vmatpush1.bf16.msra.mxu0 0
      %275 = vmatprep.subr.bf16.mxu0 0
      %276 = vmatpush1.bf16.msra.mxu0 0
      %277 = vmatprep.subr.bf16.mxu0 0
      %278 = vmatpush1.bf16.msra.mxu0 0
      %279 = vmatprep.mubr.bf16.mxu0 0
      %280 = vmatmul.mubr.bf16.gmra.mrb[0].mxu0 %v245
      %v281 = vpop.f32.mrb[0].mxu0
      %v282 = vadd.f32 0.0, %v281
      %v283 = vpop.f32.mrb[0].mxu0
      %v284 = vpop.f32.mrb[0].mxu0
      %v285 = vpop.f32.mrb[0].mxu0
      %286 = vdwg.mxu0
      %v287 = vadd.f32 %v225, %v282
      %v288 = vlaneseq
      %v289 = vand.u32 %v288, 127
      %vm290 = vcmp.ge.s32.totalorder %v289, 64
      %vm291 = vcmp.lt.s32.totalorder %v289, 96
      %vm292 = vmand %vm290, %vm291
      %v293 = vtanh.pop %v287
      %v294 = vxor.u32 %v287, 2147483648
      %v295 = vmul.f32 %v294, 1.442695
      %v296 = vpow.pop %v295
      %v297 = vadd.f32 %v296, 1.0
      %v298 = vrcp.pop %v297
      %v299 = vmul.f32 1.0, %v298
      %v300 = vsel %vm292, %v293, %v299
      %302 = vrot.lane.b32.xlu0 %v224, 32
      %v303 = vpop.permute.xlu0 %302
      %v305 = vmul.f32 %v300, %v303
      %307 = vrot.lane.b32.xlu0 %v300, 64
      %v308 = vpop.permute.xlu0 %307
      %v310 = vmul.f32 %v300, %v308
      %312 = vrot.lane.b32.xlu0 %v310, 32
      %v313 = vpop.permute.xlu0 %312
      %v315 = vadd.f32 %v305, %v313
      %v316 = vtanh.pop %v315
      %318 = vrot.lane.b32.xlu0 %v316, 64
      %v319 = vpop.permute.xlu0 %318
      %v321 = vmul.f32 %v300, %v319
      %v322 = vld [vmem:[%s2] sm:$0xff]
      %v323 = vstv %s17
      %vm324 = vcmp.lt.s32.totalorder %v323, %v322
      %v325 = vsel %vm324, 1, 0
      %326 = vset.pattern.permute.xlu0 0
      %327 = vperm.xlu0 %326, %v325
      %v328 = vpop.permute.xlu0 %327
      %vm329 = vcmp.eq.s32.totalorder %v328, 1
      %331 = vrot.lane.b32.xlu0 %v223, 96
      %v332 = vpop.permute.xlu0 %331
      %v334 = vsel %vm329, %v321, %v332
      %v335 = vsel %vm329, %v315, %v303
      %337 = vrot.lane.b32.xlu0 %v334, 32
      %v338 = vpop.permute.xlu0 %337
      %340 = vst.msk [vmem:[#allocation2] sm:$0xff] %vm243, %v338
      %342 = vrot.lane.b32.xlu0 %v335, 96
      %v343 = vpop.permute.xlu0 %342
      %345 = vst.msk [vmem:[#allocation3] sm:$0xff] %vm243, %v343
      %346 = vst.msk [vmem:[%s214] sm:$0xff] %vm243, %v338
      %p347 = scmp.eq.s32.totalorder %s17, 7
      // Predicated region
      $region37: #{seq2seq_forward.3} parent=31 // pred_check
        %p348 = pneg %p347
      $region38: #{seq2seq_forward.3} parent=31 // pred_check_branch
        %350 = sbr.rel (%p348) target = $region40
      $region39: #{seq2seq_forward.3} parent=31 // pred_region
        %351 = vst.msk [vmem:[%s4] sm:$0xff] %vm243, %v338
        %352 = vst.msk [vmem:[%s5] sm:$0xff] %vm243, %v343
      $region40: #{seq2seq_forward.3} parent=31 // pred_fallthru
        _
      %p353 = scmp.lt.s32.totalorder %s17, 7
      %s354 = scalar_select %p353, %s17, 7
      %s355 = smul.addr %s354, 8
      %s356 = scalar_lea.vmem %s3, %s355
      // Predicated region
      $region41: #{seq2seq_forward.3} parent=31 // pred_check
        %p357 = pneg %p103
      $region42: #{seq2seq_forward.3} parent=31 // pred_check_branch
        %359 = sbr.rel (%p357) target = $region44
      $region43: #{seq2seq_forward.3} parent=31 // pred_region
        _
      $region44: #{seq2seq_forward.3} parent=31 // pred_fallthru
        _
      // Predicated region
      $region45: #{seq2seq_forward.3} parent=31 // pred_check
        %p360 = pneg %p124
      $region46: #{seq2seq_forward.3} parent=31 // pred_check_branch
        %362 = sbr.rel (%p360) target = $region48
      $region47: #{seq2seq_forward.3} parent=31 // pred_region
        _
      $region48: #{seq2seq_forward.3} parent=31 // pred_fallthru
        _
      // Predicated region
      $region49: #{seq2seq_forward.3} parent=31 // pred_check
        %p363 = pneg %p145
      $region50: #{seq2seq_forward.3} parent=31 // pred_check_branch
        %365 = sbr.rel (%p363) target = $region52
      $region51: #{seq2seq_forward.3} parent=31 // pred_region
        _
      $region52: #{seq2seq_forward.3} parent=31 // pred_fallthru
        _
      // Predicated region
      $region53: #{seq2seq_forward.3} parent=31 // pred_check
        %p366 = pneg %p124
      $region54: #{seq2seq_forward.3} parent=31 // pred_check_branch
        %368 = sbr.rel (%p366) target = $region56
      $region55: #{seq2seq_forward.3} parent=31 // pred_region
        _
      $region56: #{seq2seq_forward.3} parent=31 // pred_fallthru
        _
      // Predicated region
      $region57: #{seq2seq_forward.3} parent=31 // pred_check
        %p369 = pneg %p145
      $region58: #{seq2seq_forward.3} parent=31 // pred_check_branch
        %371 = sbr.rel (%p369) target = $region60
      $region59: #{seq2seq_forward.3} parent=31 // pred_region
        _
      $region60: #{seq2seq_forward.3} parent=31 // pred_fallthru
        _
    $region32: #{seq2seq_forward.3} parent=5 // pred_fallthru
      _
    %p372 = scmp.le.s32.totalorder 2, %s12
    // Predicated region
    $region61: #{seq2seq_forward.3} parent=5 // pred_check
      %p373 = pneg %p372
    $region62: #{seq2seq_forward.3} parent=5 // pred_check_branch
      %375 = sbr.rel (%p373) target = $region64
    $region63: #{seq2seq_forward.3} parent=5 // pred_region
      %s376 = ssub.s32 %s12, 2
      // Predicated region
      $region65: #{seq2seq_forward.3} parent=63 // pred_check
        %p377 = pneg %p109
      $region66: #{seq2seq_forward.3} parent=63 // pred_check_branch
        %379 = sbr.rel (%p377) target = $region68
      $region67: #{seq2seq_forward.3} parent=63 // pred_region
        %p380 = scmp.lt.s32.totalorder %s18, 7
        %s381 = scalar_select %p380, %s18, 7
        %s382 = smul.addr %s381, 8
        %s383 = scalar_lea.vmem %s3, %s382
      $region68: #{seq2seq_forward.3} parent=63 // pred_fallthru
        _
    $region64: #{seq2seq_forward.3} parent=5 // pred_fallthru
      _
  $region6: #{seq2seq_forward.3} parent=0 // loop_footer
    %s16 = sadd.s32 1, %s12
  $region7: #{seq2seq_forward.3} parent=0 // loop_footer_branch
    %11 = sbr.rel target = $region3
  $region8: #{seq2seq_forward.3} parent=0 // loop_exit
    _

// kernel: seq2seq_forward.5
$region0: #{seq2seq_forward.5}
  #allocation0 [shape = 'u32[]', space=smem, size = 0x4, offset = 0x4, fixed_abs, tag = 'smem constant byte address 0x4 - core index']
  #allocation1 [shape = 'u32[144,128]{1,0:T(1,128)}', space=vmem, size = 0x12000, scoped, tag = 'internal scratch']
  #allocation2 [shape = 'f32[2,8,32]{2,1,0:T(8,128)}', space=vmem, size = 0x2000, scoped, tag = 'scratch operand']
  #allocation3 [shape = 'f32[2,8,32]{2,1,0:T(8,128)}', space=vmem, size = 0x2000, scoped, tag = 'scratch operand']
  #allocation4 [shape = 'f32[8,1]{1,0:T(8,128)}', space=vmem, size = 0x1000, scoped, tag = 'scratch operand']
  %s0 = inlined_call_operand.vmem [shape: f32[7,8,128], index: 0, kind: input, shape index: {}]
  %s1 = inlined_call_operand.vmem [shape: bf16[2,32,128], index: 1, kind: input, shape index: {}]
  %s2 = inlined_call_operand.vmem [shape: bf16[2,32,128], index: 2, kind: input, shape index: {}]
  %s3 = inlined_call_operand.vmem [shape: f32[2,1,128], index: 3, kind: input, shape index: {}]
  %s4 = inlined_call_operand.vmem [shape: f32[2,8,32], index: 4, kind: input, shape index: {}]
  %s5 = inlined_call_operand.vmem [shape: f32[2,8,32], index: 5, kind: input, shape index: {}]
  %s6 = inlined_call_operand.vmem [shape: f32[7,8,128], index: 6, kind: input, shape index: {}]
  %s7 = inlined_call_operand.vmem [shape: bf16[32,128], index: 7, kind: input, shape index: {}]
  %s8 = inlined_call_operand.vmem [shape: f32[1,128], index: 8, kind: input, shape index: {}]
  %s9 = inlined_call_operand.vmem [shape: f32[8,1], index: 9, kind: output, shape index: {}]
  %s10 = sld [smem:[#allocation0]]
  $region81: #{seq2seq_forward.5} parent=0
    _
  %s12 = ssub.s32 1, %s10
  %s13 = scalar_select 0, %s12, %s10
  loop: start=0, step=1, limit=9
  $region2: #{seq2seq_forward.5} parent=0 // loop_pre_header
    _
  $region3: #{seq2seq_forward.5} parent=0 // loop_header
    %s15 = sphi 0, %s19
    %p16 = scmp.ge.s32.totalorder %s15, 9
    %s25 = sphi 0, %s27
    %s28 = sphi 0, %s25
    %s29 = sphi 0, %s28
    %s45 = sphi 0, %s29
    %s49 = sphi 0, %s49
    %s51 = sphi 0, %s49
    %s52 = sphi 0, %s51
    %s66 = sphi 0, %s52
    %s70 = sphi 0, %s70
    %s72 = sphi 0, %s70
    %s73 = sphi 0, %s72
    %s87 = sphi 0, %s73
    %s91 = sphi 0, %s91
    %s93 = sphi 0, %s91
    %s94 = sphi 0, %s93
    %s108 = sphi 0, %s94
    %s112 = sphi 0, %s112
    %s114 = sphi 0, %s112
    %s115 = sphi 0, %s114
    %s129 = sphi 0, %s115
    %s133 = sphi 0, %s133
    %s135 = sphi 0, %s133
    %s136 = sphi 0, %s135
    %s150 = sphi 0, %s136
    %s156 = sphi 0, %s158
    %s159 = sphi 0, %s156
    %s160 = sphi 0, %s159
    %s176 = sphi 0, %s160
    %s180 = sphi 0, %s180
    %s182 = sphi 0, %s180
    %s183 = sphi 0, %s182
    %s197 = sphi 0, %s183
    %s201 = sphi 0, %s201
    %s203 = sphi 0, %s201
    %s204 = sphi 0, %s203
    %s218 = sphi 0, %s204
    %s222 = sphi 0, %s222
    %s224 = sphi 0, %s222
    %s225 = sphi 0, %s224
    %s239 = sphi 0, %s225
  $region4: #{seq2seq_forward.5} parent=0 // loop_header_branch
    %18 = sbr.rel (%p16) target = $region8
  $region5: #{seq2seq_forward.5} parent=0 // loop_body
    %s20 = ssub.s32 %s15, 1
    %s21 = ssub.s32 %s15, 2
    %s22 = sadd.s32 %s15, 1
    %s23 = ssub.s32 %s15, %s22
    %p24 = scmp.eq.s32.totalorder %s23, 0
    %s26 = sadd.s32 %s25, 1
    %s27 = scalar_select %p24, %s25, %s26
    %p30 = pneg %p24
    %p31 = scmp.eq.s32.totalorder %s15, 6
    %p32 = por %p30, %p31
    %p33 = scmp.ne.s32.totalorder %s25, %s28
    %p34 = scmp.eq.s32.totalorder %s15, 0
    %p35 = por %p33, %p34
    %p36 = scmp.ne.s32.totalorder %s25, %s28
    %p37 = scmp.eq.s32.totalorder %s20, 6
    %p38 = por %p36, %p37
    %p39 = scmp.ne.s32.totalorder %s28, %s29
    %p40 = scmp.eq.s32.totalorder %s20, 0
    %p41 = por %p39, %p40
    %p42 = scmp.ne.s32.totalorder %s28, %s29
    %p43 = scmp.eq.s32.totalorder %s21, 6
    %p44 = por %p42, %p43
    %p46 = scmp.ne.s32.totalorder %s29, %s45
    %p47 = scmp.eq.s32.totalorder %s21, 0
    %p48 = por %p46, %p47
    %s50 = sadd.s32 %s49, 1
    %p53 = scmp.eq.s32.totalorder %s15, 6
    %p54 = scmp.ne.s32.totalorder %s49, %s51
    %p55 = scmp.eq.s32.totalorder %s15, 0
    %p56 = por %p54, %p55
    %p57 = scmp.ne.s32.totalorder %s49, %s51
    %p58 = scmp.eq.s32.totalorder %s20, 6
    %p59 = por %p57, %p58
    %p60 = scmp.ne.s32.totalorder %s51, %s52
    %p61 = scmp.eq.s32.totalorder %s20, 0
    %p62 = por %p60, %p61
    %p63 = scmp.ne.s32.totalorder %s51, %s52
    %p64 = scmp.eq.s32.totalorder %s21, 6
    %p65 = por %p63, %p64
    %p67 = scmp.ne.s32.totalorder %s52, %s66
    %p68 = scmp.eq.s32.totalorder %s21, 0
    %p69 = por %p67, %p68
    %s71 = sadd.s32 %s70, 1
    %p74 = scmp.eq.s32.totalorder %s15, 6
    %p75 = scmp.ne.s32.totalorder %s70, %s72
    %p76 = scmp.eq.s32.totalorder %s15, 0
    %p77 = por %p75, %p76
    %p78 = scmp.ne.s32.totalorder %s70, %s72
    %p79 = scmp.eq.s32.totalorder %s20, 6
    %p80 = por %p78, %p79
    %p81 = scmp.ne.s32.totalorder %s72, %s73
    %p82 = scmp.eq.s32.totalorder %s20, 0
    %p83 = por %p81, %p82
    %p84 = scmp.ne.s32.totalorder %s72, %s73
    %p85 = scmp.eq.s32.totalorder %s21, 6
    %p86 = por %p84, %p85
    %p88 = scmp.ne.s32.totalorder %s73, %s87
    %p89 = scmp.eq.s32.totalorder %s21, 0
    %p90 = por %p88, %p89
    %s92 = sadd.s32 %s91, 1
    %p95 = scmp.eq.s32.totalorder %s15, 6
    %p96 = scmp.ne.s32.totalorder %s91, %s93
    %p97 = scmp.eq.s32.totalorder %s15, 0
    %p98 = por %p96, %p97
    %p99 = scmp.ne.s32.totalorder %s91, %s93
    %p100 = scmp.eq.s32.totalorder %s20, 6
    %p101 = por %p99, %p100
    %p102 = scmp.ne.s32.totalorder %s93, %s94
    %p103 = scmp.eq.s32.totalorder %s20, 0
    %p104 = por %p102, %p103
    %p105 = scmp.ne.s32.totalorder %s93, %s94
    %p106 = scmp.eq.s32.totalorder %s21, 6
    %p107 = por %p105, %p106
    %p109 = scmp.ne.s32.totalorder %s94, %s108
    %p110 = scmp.eq.s32.totalorder %s21, 0
    %p111 = por %p109, %p110
    %s113 = sadd.s32 %s112, 1
    %p116 = scmp.eq.s32.totalorder %s15, 6
    %p117 = scmp.ne.s32.totalorder %s112, %s114
    %p118 = scmp.eq.s32.totalorder %s15, 0
    %p119 = por %p117, %p118
    %p120 = scmp.ne.s32.totalorder %s112, %s114
    %p121 = scmp.eq.s32.totalorder %s20, 6
    %p122 = por %p120, %p121
    %p123 = scmp.ne.s32.totalorder %s114, %s115
    %p124 = scmp.eq.s32.totalorder %s20, 0
    %p125 = por %p123, %p124
    %p126 = scmp.ne.s32.totalorder %s114, %s115
    %p127 = scmp.eq.s32.totalorder %s21, 6
    %p128 = por %p126, %p127
    %p130 = scmp.ne.s32.totalorder %s115, %s129
    %p131 = scmp.eq.s32.totalorder %s21, 0
    %p132 = por %p130, %p131
    %s134 = sadd.s32 %s133, 1
    %p137 = scmp.eq.s32.totalorder %s15, 6
    %p138 = scmp.ne.s32.totalorder %s133, %s135
    %p139 = scmp.eq.s32.totalorder %s15, 0
    %p140 = por %p138, %p139
    %p141 = scmp.ne.s32.totalorder %s133, %s135
    %p142 = scmp.eq.s32.totalorder %s20, 6
    %p143 = por %p141, %p142
    %p144 = scmp.ne.s32.totalorder %s135, %s136
    %p145 = scmp.eq.s32.totalorder %s20, 0
    %p146 = por %p144, %p145
    %p147 = scmp.ne.s32.totalorder %s135, %s136
    %p148 = scmp.eq.s32.totalorder %s21, 6
    %p149 = por %p147, %p148
    %p151 = scmp.ne.s32.totalorder %s136, %s150
    %p152 = scmp.eq.s32.totalorder %s21, 0
    %p153 = por %p151, %p152
    %s154 = ssub.s32 %s15, %s22
    %p155 = scmp.eq.s32.totalorder %s154, 0
    %s157 = sadd.s32 %s156, 1
    %s158 = scalar_select %p155, %s156, %s157
    %p161 = pneg %p155
    %p162 = scmp.eq.s32.totalorder %s15, 6
    %p163 = por %p161, %p162
    %p164 = scmp.ne.s32.totalorder %s156, %s159
    %p165 = scmp.eq.s32.totalorder %s15, 0
    %p166 = por %p164, %p165
    %p167 = scmp.ne.s32.totalorder %s156, %s159
    %p168 = scmp.eq.s32.totalorder %s20, 6
    %p169 = por %p167, %p168
    %p170 = scmp.ne.s32.totalorder %s159, %s160
    %p171 = scmp.eq.s32.totalorder %s20, 0
    %p172 = por %p170, %p171
    %p173 = scmp.ne.s32.totalorder %s159, %s160
    %p174 = scmp.eq.s32.totalorder %s21, 6
    %p175 = por %p173, %p174
    %p177 = scmp.ne.s32.totalorder %s160, %s176
    %p178 = scmp.eq.s32.totalorder %s21, 0
    %p179 = por %p177, %p178
    %s181 = sadd.s32 %s180, 1
    %p184 = scmp.eq.s32.totalorder %s15, 6
    %p185 = scmp.ne.s32.totalorder %s180, %s182
    %p186 = scmp.eq.s32.totalorder %s15, 0
    %p187 = por %p185, %p186
    %p188 = scmp.ne.s32.totalorder %s180, %s182
    %p189 = scmp.eq.s32.totalorder %s20, 6
    %p190 = por %p188, %p189
    %p191 = scmp.ne.s32.totalorder %s182, %s183
    %p192 = scmp.eq.s32.totalorder %s20, 0
    %p193 = por %p191, %p192
    %p194 = scmp.ne.s32.totalorder %s182, %s183
    %p195 = scmp.eq.s32.totalorder %s21, 6
    %p196 = por %p194, %p195
    %p198 = scmp.ne.s32.totalorder %s183, %s197
    %p199 = scmp.eq.s32.totalorder %s21, 0
    %p200 = por %p198, %p199
    %s202 = sadd.s32 %s201, 1
    %p205 = scmp.eq.s32.totalorder %s15, 6
    %p206 = scmp.ne.s32.totalorder %s201, %s203
    %p207 = scmp.eq.s32.totalorder %s15, 0
    %p208 = por %p206, %p207
    %p209 = scmp.ne.s32.totalorder %s201, %s203
    %p210 = scmp.eq.s32.totalorder %s20, 6
    %p211 = por %p209, %p210
    %p212 = scmp.ne.s32.totalorder %s203, %s204
    %p213 = scmp.eq.s32.totalorder %s20, 0
    %p214 = por %p212, %p213
    %p215 = scmp.ne.s32.totalorder %s203, %s204
    %p216 = scmp.eq.s32.totalorder %s21, 6
    %p217 = por %p215, %p216
    %p219 = scmp.ne.s32.totalorder %s204, %s218
    %p220 = scmp.eq.s32.totalorder %s21, 0
    %p221 = por %p219, %p220
    %s223 = sadd.s32 %s222, 1
    %p226 = scmp.eq.s32.totalorder %s15, 6
    %p227 = scmp.ne.s32.totalorder %s222, %s224
    %p228 = scmp.eq.s32.totalorder %s15, 0
    %p229 = por %p227, %p228
    %p230 = scmp.ne.s32.totalorder %s222, %s224
    %p231 = scmp.eq.s32.totalorder %s20, 6
    %p232 = por %p230, %p231
    %p233 = scmp.ne.s32.totalorder %s224, %s225
    %p234 = scmp.eq.s32.totalorder %s20, 0
    %p235 = por %p233, %p234
    %p236 = scmp.ne.s32.totalorder %s224, %s225
    %p237 = scmp.eq.s32.totalorder %s21, 6
    %p238 = por %p236, %p237
    %p240 = scmp.ne.s32.totalorder %s225, %s239
    %p241 = scmp.eq.s32.totalorder %s21, 0
    %p242 = por %p240, %p241
    %p243 = scmp.le.s32.totalorder 1, %s15
    %p244 = scmp.lt.s32.totalorder %s15, 8
    %p245 = pnand %p243, %p244
    %p246 = pneg %p245
    // Predicated region
    $region9: #{seq2seq_forward.5} parent=5 // pred_check
      _
    $region10: #{seq2seq_forward.5} parent=5 // pred_check_branch
      %248 = sbr.rel (%p245) target = $region12
    $region11: #{seq2seq_forward.5} parent=5 // pred_region
      %s249 = ssub.s32 %s15, 1
      // Predicated region
      $region13: #{seq2seq_forward.5} parent=11 // pred_check
        %p250 = pneg %p62
      $region14: #{seq2seq_forward.5} parent=11 // pred_check_branch
        %252 = sbr.rel (%p250) target = $region16
      $region15: #{seq2seq_forward.5} parent=11 // pred_region
        _
      $region16: #{seq2seq_forward.5} parent=11 // pred_fallthru
        _
      // Predicated region
      $region17: #{seq2seq_forward.5} parent=11 // pred_check
        %p253 = pneg %p83
      $region18: #{seq2seq_forward.5} parent=11 // pred_check_branch
        %255 = sbr.rel (%p253) target = $region20
      $region19: #{seq2seq_forward.5} parent=11 // pred_region
        _
      $region20: #{seq2seq_forward.5} parent=11 // pred_fallthru
        _
      // Predicated region
      $region21: #{seq2seq_forward.5} parent=11 // pred_check
        %p256 = pneg %p104
      $region22: #{seq2seq_forward.5} parent=11 // pred_check_branch
        %258 = sbr.rel (%p256) target = $region24
      $region23: #{seq2seq_forward.5} parent=11 // pred_region
        _
      $region24: #{seq2seq_forward.5} parent=11 // pred_fallthru
        _
      // Predicated region
      $region25: #{seq2seq_forward.5} parent=11 // pred_check
        %p259 = pneg %p125
      $region26: #{seq2seq_forward.5} parent=11 // pred_check_branch
        %261 = sbr.rel (%p259) target = $region28
      $region27: #{seq2seq_forward.5} parent=11 // pred_region
        _
      $region28: #{seq2seq_forward.5} parent=11 // pred_fallthru
        _
      // Predicated region
      $region29: #{seq2seq_forward.5} parent=11 // pred_check
        %p262 = pneg %p146
      $region30: #{seq2seq_forward.5} parent=11 // pred_check_branch
        %264 = sbr.rel (%p262) target = $region32
      $region31: #{seq2seq_forward.5} parent=11 // pred_region
        _
      $region32: #{seq2seq_forward.5} parent=11 // pred_fallthru
        _
      // Predicated region
      $region33: #{seq2seq_forward.5} parent=11 // pred_check
        %p265 = pneg %p193
      $region34: #{seq2seq_forward.5} parent=11 // pred_check_branch
        %267 = sbr.rel (%p265) target = $region36
      $region35: #{seq2seq_forward.5} parent=11 // pred_region
        _
      $region36: #{seq2seq_forward.5} parent=11 // pred_fallthru
        _
      // Predicated region
      $region37: #{seq2seq_forward.5} parent=11 // pred_check
        %p268 = pneg %p214
      $region38: #{seq2seq_forward.5} parent=11 // pred_check_branch
        %270 = sbr.rel (%p268) target = $region40
      $region39: #{seq2seq_forward.5} parent=11 // pred_region
        _
      $region40: #{seq2seq_forward.5} parent=11 // pred_fallthru
        _
    $region12: #{seq2seq_forward.5} parent=5 // pred_fallthru
      _
    %p271 = scmp.lt.s32.totalorder %s15, 7
    // Predicated region
    $region41: #{seq2seq_forward.5} parent=5 // pred_check
      %p272 = pneg %p271
    $region42: #{seq2seq_forward.5} parent=5 // pred_check_branch
      %274 = sbr.rel (%p272) target = $region44
    $region43: #{seq2seq_forward.5} parent=5 // pred_region
      // Predicated region
      $region45: #{seq2seq_forward.5} parent=43 // pred_check
        %p275 = pneg %p35
      $region46: #{seq2seq_forward.5} parent=43 // pred_check_branch
        %277 = sbr.rel (%p275) target = $region48
      $region47: #{seq2seq_forward.5} parent=43 // pred_region
        %p278 = scmp.lt.s32.totalorder %s15, 6
        %s279 = scalar_select %p278, %s15, 6
        %s280 = smul.addr %s279, 8
        %s281 = scalar_lea.vmem %s0, %s280
      $region48: #{seq2seq_forward.5} parent=43 // pred_fallthru
        _
      // Predicated region
      $region49: #{seq2seq_forward.5} parent=43 // pred_check
        %p282 = pneg %p166
      $region50: #{seq2seq_forward.5} parent=43 // pred_check_branch
        %284 = sbr.rel (%p282) target = $region52
      $region51: #{seq2seq_forward.5} parent=43 // pred_region
        %p285 = scmp.lt.s32.totalorder %s15, 6
        %s286 = scalar_select %p285, %s15, 6
        %s287 = smul.addr %s286, 8
        %s288 = scalar_lea.vmem %s6, %s287
      $region52: #{seq2seq_forward.5} parent=43 // pred_fallthru
        _
    $region44: #{seq2seq_forward.5} parent=5 // pred_fallthru
      _
    %p289 = scmp.le.s32.totalorder 1, %s15
    %p290 = scmp.lt.s32.totalorder %s15, 8
    %p291 = pnand %p289, %p290
    %p292 = pneg %p291
    // Predicated region
    $region53: #{seq2seq_forward.5} parent=5 // pred_check
      _
    $region54: #{seq2seq_forward.5} parent=5 // pred_check_branch
      %294 = sbr.rel (%p291) target = $region56
    $region55: #{seq2seq_forward.5} parent=5 // pred_region
      %s295 = ssub.s32 %s15, 1
      %p296 = scmp.lt.s32.totalorder %s20, 6
      %s297 = scalar_select %p296, %s20, 6
      %s298 = smul.addr %s297, 8
      %s299 = scalar_lea.vmem %s0, %s298
      %p300 = pneg %p41
      %p301 = pneg %p38
      %p302 = pneg %p62
      %p303 = pneg %p59
      %p304 = pneg %p83
      %p305 = pneg %p80
      %p306 = pneg %p104
      %p307 = pneg %p101
      %p308 = pneg %p125
      %p309 = pneg %p122
      %p310 = pneg %p146
      %p311 = pneg %p143
      %p312 = scmp.lt.s32.totalorder %s20, 6
      %s313 = scalar_select %p312, %s20, 6
      %s314 = smul.addr %s313, 8
      %s315 = scalar_lea.vmem %s6, %s314
      %p316 = pneg %p172
      %p317 = pneg %p169
      %p318 = pneg %p193
      %p319 = pneg %p190
      %p320 = pneg %p214
      %p321 = pneg %p211
      %p322 = pneg %p235
      %p323 = pneg %p232
      %p324 = scmp.lt.s32.totalorder %s20, 6
      %s325 = scalar_select %p324, %s20, 6
      %s326 = smul.addr %s325, 8
      %s327 = scalar_lea.vmem %s0, %s326
      %p328 = scmp.lt.s32.totalorder %s20, 6
      %s329 = scalar_select %p328, %s20, 6
      %s330 = smul.addr %s329, 8
      %s331 = scalar_lea.vmem %s6, %s330
      %p333 = scmp.eq.s32.totalorder %s20, 0
      // Predicated region
      $region57: #{seq2seq_forward.5} parent=55 // pred_check
        %p334 = pneg %p333
      $region58: #{seq2seq_forward.5} parent=55 // pred_check_branch
        %336 = sbr.rel (%p334) target = $region60
      $region59: #{seq2seq_forward.5} parent=55 // pred_region
        %v337 = vld [vmem:[%s4] sm:$0xff]
        %v338 = vld [vmem:[%s4 + $0x8] sm:$0xff]
        %vm339 = vcmask 261120
        %340 = vst.msk [vmem:[#allocation2] sm:$0xff] %vm339, %v337
        %341 = vst.msk [vmem:[#allocation2 + $0x8] sm:$0xff] %vm339, %v338
        %v342 = vld [vmem:[%s5] sm:$0xff]
        %v343 = vld [vmem:[%s5 + $0x8] sm:$0xff]
        %344 = vst.msk [vmem:[#allocation3] sm:$0xff] %vm339, %v342
        %345 = vst.msk [vmem:[#allocation3 + $0x8] sm:$0xff] %vm339, %v343
        %vm346 = vcmask 7168
        %347 = vst.msk [vmem:[#allocation4] sm:$0xff] %vm346, 0.0
      $region60: #{seq2seq_forward.5} parent=55 // pred_fallthru
        _
      %v348 = vld [vmem:[%s327] sm:$0xff]
      %v349 = vld [vmem:[#allocation2] sm:$0xff]
      %v350 = vld [vmem:[#allocation3] sm:$0xff]
      %v351 = vpack.c.bf16 %v349, %v349
      %v352 = vld [vmem:[%s2] sm:$0xf]
      %v353 = vld [vmem:[%s2 + $0x4] sm:$0xf]
      %v354 = vld [vmem:[%s2 + $0x8] sm:$0xf]
      %v355 = vld [vmem:[%s2 + $0xc] sm:$0xf]
      %v360 = vunpack.c.l.b16 %v352
      %v361 = vunpack.c.l.b16 %v353
      %v362 = vunpack.c.l.b16 %v354
      %v363 = vunpack.c.l.b16 %v355
      %v364 = vpack.c.b16 %v361, %v360
      %v365 = vpack.c.b16 %v363, %v362
      %vm368 = vcmask 261120
      %v370 = vsel %vm368, %v351, 0
      %372 = vmatprep.subr.bf16.mxu0 0
      %373 = vmatpush1.bf16.msra.mxu0 %v364
      %374 = vmatprep.subr.bf16.mxu0 0
      %375 = vmatpush1.bf16.msra.mxu0 %v365
      %376 = vmatprep.subr.bf16.mxu0 0
      %377 = vmatpush1.bf16.msra.mxu0 0
      %378 = vmatprep.subr.bf16.mxu0 0
      %379 = vmatpush1.bf16.msra.mxu0 0
      %380 = vmatprep.subr.bf16.mxu0 0
      %381 = vmatpush1.bf16.msra.mxu0 0
      %382 = vmatprep.subr.bf16.mxu0 0
      %383 = vmatpush1.bf16.msra.mxu0 0
      %384 = vmatprep.subr.bf16.mxu0 0
      %385 = vmatpush1.bf16.msra.mxu0 0
      %386 = vmatprep.subr.bf16.mxu0 0
      %387 = vmatpush1.bf16.msra.mxu0 0
      %388 = vmatprep.subr.bf16.mxu0 0
      %389 = vmatpush1.bf16.msra.mxu0 0
      %390 = vmatprep.subr.bf16.mxu0 0
      %391 = vmatpush1.bf16.msra.mxu0 0
      %392 = vmatprep.subr.bf16.mxu0 0
      %393 = vmatpush1.bf16.msra.mxu0 0
      %394 = vmatprep.subr.bf16.mxu0 0
      %395 = vmatpush1.bf16.msra.mxu0 0
      %396 = vmatprep.subr.bf16.mxu0 0
      %397 = vmatpush1.bf16.msra.mxu0 0
      %398 = vmatprep.subr.bf16.mxu0 0
      %399 = vmatpush1.bf16.msra.mxu0 0
      %400 = vmatprep.subr.bf16.mxu0 0
      %401 = vmatpush1.bf16.msra.mxu0 0
      %402 = vmatprep.subr.bf16.mxu0 0
      %403 = vmatpush1.bf16.msra.mxu0 0
      %404 = vmatprep.mubr.bf16.mxu0 0
      %405 = vmatmul.mubr.bf16.gmra.mrb[0].mxu0 %v370
      %v406 = vpop.f32.mrb[0].mxu0
      %v407 = vadd.f32 0.0, %v406
      %v408 = vpop.f32.mrb[0].mxu0
      %v409 = vpop.f32.mrb[0].mxu0
      %v410 = vpop.f32.mrb[0].mxu0
      %411 = vdwg.mxu0
      %v412 = vadd.f32 %v348, %v407
      %v413 = vlaneseq
      %v414 = vand.u32 %v413, 127
      %vm415 = vcmp.ge.s32.totalorder %v414, 64
      %vm416 = vcmp.lt.s32.totalorder %v414, 96
      %vm417 = vmand %vm415, %vm416
      %v418 = vtanh.pop %v412
      %v419 = vxor.u32 %v412, 2147483648
      %v420 = vmul.f32 %v419, 1.442695
      %v421 = vpow.pop %v420
      %v422 = vadd.f32 %v421, 1.0
      %v423 = vrcp.pop %v422
      %v424 = vmul.f32 1.0, %v423
      %v425 = vsel %vm417, %v418, %v424
      %427 = vrot.lane.b32.xlu0 %v350, 32
      %v428 = vpop.permute.xlu0 %427
      %v430 = vmul.f32 %v425, %v428
      %432 = vrot.lane.b32.xlu0 %v425, 64
      %v433 = vpop.permute.xlu0 %432
      %v435 = vmul.f32 %v425, %v433
      %437 = vrot.lane.b32.xlu0 %v435, 32
      %v438 = vpop.permute.xlu0 %437
      %v440 = vadd.f32 %v430, %v438
      %v441 = vtanh.pop %v440
      %443 = vrot.lane.b32.xlu0 %v441, 64
      %v444 = vpop.permute.xlu0 %443
      %v446 = vmul.f32 %v425, %v444
      %448 = vrot.lane.b32.xlu0 %v446, 32
      %v449 = vpop.permute.xlu0 %448
      %451 = vst.msk [vmem:[#allocation2] sm:$0xff] %vm368, %v449
      %453 = vrot.lane.b32.xlu0 %v440, 96
      %v454 = vpop.permute.xlu0 %453
      %456 = vst.msk [vmem:[#allocation3] sm:$0xff] %vm368, %v454
      %s457 = scalar_lea.vmem [#allocation2], 8
      %v458 = vld [vmem:[%s457] sm:$0xff]
      %s459 = scalar_lea.vmem [#allocation3], 8
      %v460 = vld [vmem:[%s459] sm:$0xff]
      %v461 = vpack.c.bf16 %v446, %v446
      %s462 = scalar_lea.vmem %s1, 16
      %v463 = vld [vmem:[%s462] sm:$0xf]
      %v464 = vld [vmem:[%s462 + $0x4] sm:$0xf]
      %v465 = vld [vmem:[%s462 + $0x8] sm:$0xf]
      %v466 = vld [vmem:[%s462 + $0xc] sm:$0xf]
      %s467 = scalar_lea.vmem %s3, 1
      %v468 = vld [vmem:[%s467] sm:$0x1]
      %v470 = vlaneseq
      %v471 = vshrl.u32 %v470, 7
      %v472 = vsub.s32 0, %v471
      %v473 = vrot.slane %v468, %v472
      %476 = vrot.lane.b32.xlu0 %v461, 32
      %v477 = vpop.permute.xlu0 %476
      %v482 = vunpack.c.l.b16 %v463
      %v483 = vunpack.c.l.b16 %v464
      %v484 = vunpack.c.l.b16 %v465
      %v485 = vunpack.c.l.b16 %v466
      %v486 = vpack.c.b16 %v483, %v482
      %v487 = vpack.c.b16 %v485, %v484
      %v491 = vsel %vm368, %v477, 0
      %493 = vmatprep.subr.bf16.mxu0 0
      %494 = vmatpush1.bf16.msra.mxu0 %v486
      %495 = vmatprep.subr.bf16.mxu0 0
      %496 = vmatpush1.bf16.msra.mxu0 %v487
      %497 = vmatprep.subr.bf16.mxu0 0
      %498 = vmatpush1.bf16.msra.mxu0 0
      %499 = vmatprep.subr.bf16.mxu0 0
      %500 = vmatpush1.bf16.msra.mxu0 0
      %501 = vmatprep.subr.bf16.mxu0 0
      %502 = vmatpush1.bf16.msra.mxu0 0
      %503 = vmatprep.subr.bf16.mxu0 0
      %504 = vmatpush1.bf16.msra.mxu0 0
      %505 = vmatprep.subr.bf16.mxu0 0
      %506 = vmatpush1.bf16.msra.mxu0 0
      %507 = vmatprep.subr.bf16.mxu0 0
      %508 = vmatpush1.bf16.msra.mxu0 0
      %509 = vmatprep.subr.bf16.mxu0 0
      %510 = vmatpush1.bf16.msra.mxu0 0
      %511 = vmatprep.subr.bf16.mxu0 0
      %512 = vmatpush1.bf16.msra.mxu0 0
      %513 = vmatprep.subr.bf16.mxu0 0
      %514 = vmatpush1.bf16.msra.mxu0 0
      %515 = vmatprep.subr.bf16.mxu0 0
      %516 = vmatpush1.bf16.msra.mxu0 0
      %517 = vmatprep.subr.bf16.mxu0 0
      %518 = vmatpush1.bf16.msra.mxu0 0
      %519 = vmatprep.subr.bf16.mxu0 0
      %520 = vmatpush1.bf16.msra.mxu0 0
      %521 = vmatprep.subr.bf16.mxu0 0
      %522 = vmatpush1.bf16.msra.mxu0 0
      %523 = vmatprep.subr.bf16.mxu0 0
      %524 = vmatpush1.bf16.msra.mxu0 0
      %525 = vmatprep.mubr.bf16.mxu0 0
      %526 = vmatmul.mubr.bf16.gmra.mrb[0].mxu0 %v491
      %v527 = vpop.f32.mrb[0].mxu0
      %v528 = vadd.f32 %v473, %v527
      %v529 = vpop.f32.mrb[0].mxu0
      %v530 = vpop.f32.mrb[0].mxu0
      %v531 = vpop.f32.mrb[0].mxu0
      %532 = vdwg.mxu0
      %v533 = vpack.c.bf16 %v458, %v458
      %s534 = scalar_lea.vmem %s2, 16
      %v535 = vld [vmem:[%s534] sm:$0xf]
      %v536 = vld [vmem:[%s534 + $0x4] sm:$0xf]
      %v537 = vld [vmem:[%s534 + $0x8] sm:$0xf]
      %v538 = vld [vmem:[%s534 + $0xc] sm:$0xf]
      %v543 = vunpack.c.l.b16 %v535
      %v544 = vunpack.c.l.b16 %v536
      %v545 = vunpack.c.l.b16 %v537
      %v546 = vunpack.c.l.b16 %v538
      %v547 = vpack.c.b16 %v544, %v543
      %v548 = vpack.c.b16 %v546, %v545
      %v552 = vsel %vm368, %v533, 0
      %554 = vmatprep.subr.bf16.mxu0 0
      %555 = vmatpush1.bf16.msra.mxu0 %v547
      %556 = vmatprep.subr.bf16.mxu0 0
      %557 = vmatpush1.bf16.msra.mxu0 %v548
      %558 = vmatprep.subr.bf16.mxu0 0
      %559 = vmatpush1.bf16.msra.mxu0 0
      %560 = vmatprep.subr.bf16.mxu0 0
      %561 = vmatpush1.bf16.msra.mxu0 0
      %562 = vmatprep.subr.bf16.mxu0 0
      %563 = vmatpush1.bf16.msra.mxu0 0
      %564 = vmatprep.subr.bf16.mxu0 0
      %565 = vmatpush1.bf16.msra.mxu0 0
      %566 = vmatprep.subr.bf16.mxu0 0
      %567 = vmatpush1.bf16.msra.mxu0 0
      %568 = vmatprep.subr.bf16.mxu0 0
      %569 = vmatpush1.bf16.msra.mxu0 0
      %570 = vmatprep.subr.bf16.mxu0 0
      %571 = vmatpush1.bf16.msra.mxu0 0
      %572 = vmatprep.subr.bf16.mxu0 0
      %573 = vmatpush1.bf16.msra.mxu0 0
      %574 = vmatprep.subr.bf16.mxu0 0
      %575 = vmatpush1.bf16.msra.mxu0 0
      %576 = vmatprep.subr.bf16.mxu0 0
      %577 = vmatpush1.bf16.msra.mxu0 0
      %578 = vmatprep.subr.bf16.mxu0 0
      %579 = vmatpush1.bf16.msra.mxu0 0
      %580 = vmatprep.subr.bf16.mxu0 0
      %581 = vmatpush1.bf16.msra.mxu0 0
      %582 = vmatprep.subr.bf16.mxu0 0
      %583 = vmatpush1.bf16.msra.mxu0 0
      %584 = vmatprep.subr.bf16.mxu0 0
      %585 = vmatpush1.bf16.msra.mxu0 0
      %586 = vmatprep.mubr.bf16.mxu0 0
      %587 = vmatmul.mubr.bf16.gmra.mrb[0].mxu0 %v552
      %v588 = vpop.f32.mrb[0].mxu0
      %v589 = vadd.f32 0.0, %v588
      %v590 = vpop.f32.mrb[0].mxu0
      %v591 = vpop.f32.mrb[0].mxu0
      %v592 = vpop.f32.mrb[0].mxu0
      %593 = vdwg.mxu0
      %v594 = vadd.f32 %v528, %v589
      %v595 = vtanh.pop %v594
      %v596 = vxor.u32 %v594, 2147483648
      %v597 = vmul.f32 %v596, 1.442695
      %v598 = vpow.pop %v597
      %v599 = vadd.f32 %v598, 1.0
      %v600 = vrcp.pop %v599
      %v601 = vmul.f32 1.0, %v600
      %v602 = vsel %vm417, %v595, %v601
      %604 = vrot.lane.b32.xlu0 %v460, 32
      %v605 = vpop.permute.xlu0 %604
      %v607 = vmul.f32 %v602, %v605
      %609 = vrot.lane.b32.xlu0 %v602, 64
      %v610 = vpop.permute.xlu0 %609
      %v612 = vmul.f32 %v602, %v610
      %614 = vrot.lane.b32.xlu0 %v612, 32
      %v615 = vpop.permute.xlu0 %614
      %v617 = vadd.f32 %v607, %v615
      %v618 = vtanh.pop %v617
      %620 = vrot.lane.b32.xlu0 %v618, 64
      %v621 = vpop.permute.xlu0 %620
      %v623 = vmul.f32 %v602, %v621
      %625 = vrot.lane.b32.xlu0 %v623, 32
      %v626 = vpop.permute.xlu0 %625
      %628 = vst.msk [vmem:[%s457] sm:$0xff] %vm368, %v626
      %630 = vrot.lane.b32.xlu0 %v617, 96
      %v631 = vpop.permute.xlu0 %630
      %633 = vst.msk [vmem:[%s459] sm:$0xff] %vm368, %v631
      %p634 = scmp.ge.s32.totalorder %s20, 1
      // Predicated region
      $region61: #{seq2seq_forward.5} parent=55 // pred_check
        %p635 = pneg %p634
      $region62: #{seq2seq_forward.5} parent=55 // pred_check_branch
        %637 = sbr.rel (%p635) target = $region64
      $region63: #{seq2seq_forward.5} parent=55 // pred_region
        %v638 = vpack.c.bf16 %v623, %v623
        %v639 = vld [vmem:[%s7] sm:$0xf]
        %v640 = vld [vmem:[%s7 + $0x4] sm:$0xf]
        %v641 = vld [vmem:[%s7 + $0x8] sm:$0xf]
        %v642 = vld [vmem:[%s7 + $0xc] sm:$0xf]
        %v643 = vld [vmem:[%s8] sm:$0x1]
        %v645 = vlaneseq
        %v646 = vshrl.u32 %v645, 7
        %v647 = vsub.s32 0, %v646
        %v648 = vrot.slane %v643, %v647
        %651 = vrot.lane.b32.xlu0 %v638, 32
        %v652 = vpop.permute.xlu0 %651
        %v657 = vunpack.c.l.b16 %v639
        %v658 = vunpack.c.l.b16 %v640
        %v659 = vunpack.c.l.b16 %v641
        %v660 = vunpack.c.l.b16 %v642
        %v661 = vpack.c.b16 %v658, %v657
        %v662 = vpack.c.b16 %v660, %v659
        %v666 = vsel %vm368, %v652, 0
        %668 = vmatprep.subr.bf16.mxu0 0
        %669 = vmatpush1.bf16.msra.mxu0 %v661
        %670 = vmatprep.subr.bf16.mxu0 0
        %671 = vmatpush1.bf16.msra.mxu0 %v662
        %672 = vmatprep.subr.bf16.mxu0 0
        %673 = vmatpush1.bf16.msra.mxu0 0
        %674 = vmatprep.subr.bf16.mxu0 0
        %675 = vmatpush1.bf16.msra.mxu0 0
        %676 = vmatprep.subr.bf16.mxu0 0
        %677 = vmatpush1.bf16.msra.mxu0 0
        %678 = vmatprep.subr.bf16.mxu0 0
        %679 = vmatpush1.bf16.msra.mxu0 0
        %680 = vmatprep.subr.bf16.mxu0 0
        %681 = vmatpush1.bf16.msra.mxu0 0
        %682 = vmatprep.subr.bf16.mxu0 0
        %683 = vmatpush1.bf16.msra.mxu0 0
        %684 = vmatprep.subr.bf16.mxu0 0
        %685 = vmatpush1.bf16.msra.mxu0 0
        %686 = vmatprep.subr.bf16.mxu0 0
        %687 = vmatpush1.bf16.msra.mxu0 0
        %688 = vmatprep.subr.bf16.mxu0 0
        %689 = vmatpush1.bf16.msra.mxu0 0
        %690 = vmatprep.subr.bf16.mxu0 0
        %691 = vmatpush1.bf16.msra.mxu0 0
        %692 = vmatprep.subr.bf16.mxu0 0
        %693 = vmatpush1.bf16.msra.mxu0 0
        %694 = vmatprep.subr.bf16.mxu0 0
        %695 = vmatpush1.bf16.msra.mxu0 0
        %696 = vmatprep.subr.bf16.mxu0 0
        %697 = vmatpush1.bf16.msra.mxu0 0
        %698 = vmatprep.subr.bf16.mxu0 0
        %699 = vmatpush1.bf16.msra.mxu0 0
        %700 = vmatprep.mubr.bf16.mxu0 0
        %701 = vmatmul.mubr.bf16.gmra.mrb[0].mxu0 %v666
        %v702 = vpop.f32.mrb[0].mxu0
        %v703 = vadd.f32 %v648, %v702
        %v704 = vpop.f32.mrb[0].mxu0
        %v705 = vpop.f32.mrb[0].mxu0
        %v706 = vpop.f32.mrb[0].mxu0
        %707 = vdwg.mxu0
        %708 = vmax.xlane.f32.xlu0 %v703
        %v709 = vpop.xlane.xlu0 %708
        %v710 = vsub.f32 %v703, %v709
        %v711 = vmul.f32 %v710, 1.442695
        %v712 = vpow.pop %v711
        %713 = vadd.xlane.f32.xlu0 %v712
        %v714 = vpop.xlane.xlu0 %713
        %v715 = vlog2.pop %v714
        %v716 = vmul.f32 %v715, 0.6931472
        %v717 = vadd.f32 %v709, %v716
        %v718 = vld [vmem:[%s331] sm:$0xff]
        %v719 = vmul.f32 %v703, %v718
        %720 = vadd.xlane.f32.xlu0 %v719
        %v721 = vpop.xlane.xlu0 %720
        %v722 = vld [vmem:[#allocation4] sm:$0xff]
        %v723 = vsub.f32 %v717, %v721
        %v724 = vadd.f32 %v722, %v723
        %vm725 = vcmask 7168
        %726 = vst.msk [vmem:[#allocation4] sm:$0xff] %vm725, %v724
      $region64: #{seq2seq_forward.5} parent=55 // pred_fallthru
        _
      %p727 = scmp.eq.s32.totalorder %s20, 6
      // Predicated region
      $region65: #{seq2seq_forward.5} parent=55 // pred_check
        %p728 = pneg %p727
      $region66: #{seq2seq_forward.5} parent=55 // pred_check_branch
        %730 = sbr.rel (%p728) target = $region68
      $region67: #{seq2seq_forward.5} parent=55 // pred_region
        %v731 = vld [vmem:[#allocation4] sm:$0xff]
        %vm732 = vcmask 7168
        %733 = vst.msk [vmem:[%s9] sm:$0xff] %vm732, %v731
      $region68: #{seq2seq_forward.5} parent=55 // pred_fallthru
        _
      // Predicated region
      $region69: #{seq2seq_forward.5} parent=55 // pred_check
        %p734 = pneg %p232
      $region70: #{seq2seq_forward.5} parent=55 // pred_check_branch
        %736 = sbr.rel (%p734) target = $region72
      $region71: #{seq2seq_forward.5} parent=55 // pred_region
        _
      $region72: #{seq2seq_forward.5} parent=55 // pred_fallthru
        _
      // Predicated region
      $region73: #{seq2seq_forward.5} parent=55 // pred_check
        %p737 = pneg %p232
      $region74: #{seq2seq_forward.5} parent=55 // pred_check_branch
        %739 = sbr.rel (%p737) target = $region76
      $region75: #{seq2seq_forward.5} parent=55 // pred_region
        _
      $region76: #{seq2seq_forward.5} parent=55 // pred_fallthru
        _
    $region56: #{seq2seq_forward.5} parent=5 // pred_fallthru
      _
    %p740 = scmp.le.s32.totalorder 2, %s15
    // Predicated region
    $region77: #{seq2seq_forward.5} parent=5 // pred_check
      %p741 = pneg %p740
    $region78: #{seq2seq_forward.5} parent=5 // pred_check_branch
      %743 = sbr.rel (%p741) target = $region80
    $region79: #{seq2seq_forward.5} parent=5 // pred_region
      %s744 = ssub.s32 %s15, 2
    $region80: #{seq2seq_forward.5} parent=5 // pred_fallthru
      _
  $region6: #{seq2seq_forward.5} parent=0 // loop_footer
    %s19 = sadd.s32 1, %s15
  $region7: #{seq2seq_forward.5} parent=0 // loop_footer_branch
    %14 = sbr.rel target = $region3
  $region8: #{seq2seq_forward.5} parent=0 // loop_exit
    _

</llo_original>
